<compile_context>
chip_gen: v6e
topology: v6e:2x2x1
jax: 0.10.0
libtpu: 0.0.40
codegen_flags: <defaults>
</compile_context>

<pallas_src>
import functools

import jax
import jax.numpy as jnp
from jax.experimental import pallas as pl
from jax.experimental.pallas import tpu as pltpu

# ---------------- model hyper-parameters (small, consistent with the module) --------
NTOKEN = 128     # vocab size (lane-dense decoder output)
NINP = 32        # embedding size
NHID = 32        # hidden size  (NINP == NHID so one activation scratch suffices)
NLAYERS = 2      # LSTM layers
SEQ = 8          # sequence length
BATCH = 2        # batch size


# ---------------- fused Pallas kernel -------------------------------------------------
def _rnn_fused_kernel(tok_ref, emb_ref, h0_ref, c0_ref,
                      wih0_ref, whh0_ref, b0_ref,
                      wih1_ref, whh1_ref, b1_ref,
                      decw_ref, decb_ref,
                      dec_ref, hN_ref, cN_ref,
                      x_sc, g_sc, *, seq_len, batch):
    S, B = seq_len, batch
    ntoken = emb_ref.shape[0]
    H = whh0_ref.shape[0]

    # ---- embedding lookup as one-hot matmul (gather stays on the MXU, in-kernel) ----
    tok = tok_ref[...]                                               # (S*B, 1) int32
    lane_ids = jax.lax.broadcasted_iota(jnp.int32, (S * B, ntoken), 1)
    onehot = (lane_ids == tok).astype(jnp.float32)                   # (S*B, V)
    x_sc[...] = jnp.dot(onehot, emb_ref[...],
                        preferred_element_type=jnp.float32)          # (S*B, NINP)
    # self.drop(emb): inference-mode dropout == identity

    # ---- 2-layer LSTM; per-layer input projection hoisted out of the time loop ----
    layer_weights = ((wih0_ref, whh0_ref, b0_ref),
                     (wih1_ref, whh1_ref, b1_ref))
    for l, (wih_r, whh_r, b_r) in enumerate(layer_weights):
        whh_t = whh_r[...]                                           # (H, 4H), hoisted
        # gates_in = X_all @ W_ih^T + (b_ih + b_hh) for ALL timesteps in one matmul
        g_sc[...] = (jnp.dot(x_sc[...], wih_r[...],
                             preferred_element_type=jnp.float32)
                     + b_r[...])                                     # (S*B, 4H)

        h = h0_ref[l * B:(l + 1) * B, :]
        c = c0_ref[l * B:(l + 1) * B, :]
        for t in range(S):                                           # fully unrolled
            gates = (g_sc[t * B:(t + 1) * B, :]
                     + jnp.dot(h, whh_t, preferred_element_type=jnp.float32))
            # whole-vreg EUP activations, then static lane slices (i, f, g, o order)
            sig = jax.nn.sigmoid(gates)
            tnh = jnp.tanh(gates)
            i_g = sig[:, 0 * H:1 * H]
            f_g = sig[:, 1 * H:2 * H]
            g_g = tnh[:, 2 * H:3 * H]
            o_g = sig[:, 3 * H:4 * H]
            c = f_g * c + i_g * g_g
            h = o_g * jnp.tanh(c)
            x_sc[t * B:(t + 1) * B, :] = h        # in-place: next layer's input
        hN_ref[l * B:(l + 1) * B, :] = h          # final states written exactly once
        cN_ref[l * B:(l + 1) * B, :] = c
        # inter-layer dropout of nn.LSTM is identity at inference time

    # ---- decoder: logits = h_all @ W_dec^T + b, single lane-dense slab store ----
    dec_ref[...] = (jnp.dot(x_sc[...], decw_ref[...],
                            preferred_element_type=jnp.float32) + decb_ref[...])


def _full_spec(shape):
    n = len(shape)
    return pl.BlockSpec(shape, lambda: (0,) * n)


def rnn_model_forward_impl(tokens, h0, c0, params):
    """forward(input, hidden) of RNNModel with rnn_type='LSTM' (inference mode)."""
    S, B = tokens.shape
    H, V, I = NHID, NTOKEN, NINP
    assert I == H, "single in-place activation scratch requires NINP == NHID"

    tok_flat = tokens.reshape(S * B, 1).astype(jnp.int32)
    h0_flat = h0.reshape(NLAYERS * B, H)
    c0_flat = c0.reshape(NLAYERS * B, H)

    kernel = functools.partial(_rnn_fused_kernel, seq_len=S, batch=B)

    dec_flat, hN_flat, cN_flat = pl.pallas_call(
        kernel,
        out_shape=(jax.ShapeDtypeStruct((S * B, V), jnp.float32),
                   jax.ShapeDtypeStruct((NLAYERS * B, H), jnp.float32),
                   jax.ShapeDtypeStruct((NLAYERS * B, H), jnp.float32)),
        in_specs=[
            _full_spec((S * B, 1)),            # token ids
            _full_spec((NTOKEN, I)),           # embedding table
            _full_spec((NLAYERS * B, H)),      # h0 (flattened layers)
            _full_spec((NLAYERS * B, H)),      # c0
            _full_spec((I, 4 * H)),            # W_ih^T layer 0
            _full_spec((H, 4 * H)),            # W_hh^T layer 0
            _full_spec((1, 4 * H)),            # b_ih + b_hh layer 0
            _full_spec((H, 4 * H)),            # W_ih^T layer 1
            _full_spec((H, 4 * H)),            # W_hh^T layer 1
            _full_spec((1, 4 * H)),            # b_ih + b_hh layer 1
            _full_spec((H, V)),                # decoder W^T
            _full_spec((1, V)),                # decoder bias
        ],
        out_specs=(_full_spec((S * B, V)),
                   _full_spec((NLAYERS * B, H)),
                   _full_spec((NLAYERS * B, H))),
        scratch_shapes=[pltpu.VMEM((S * B, H), jnp.float32),      # activations
                        pltpu.VMEM((S * B, 4 * H), jnp.float32)], # hoisted gates_in
    )(tok_flat, params["emb"], h0_flat, c0_flat,
      params["wih0_t"], params["whh0_t"], params["b0"],
      params["wih1_t"], params["whh1_t"], params["b1"],
      params["dec_w_t"], params["dec_b"])

    decoded = dec_flat.reshape(S, B, V)
    hN = hN_flat.reshape(NLAYERS, B, H)
    cN = cN_flat.reshape(NLAYERS, B, H)
    return decoded, (hN, cN)


rnn_model_forward = jax.jit(rnn_model_forward_impl)


# ---------------- parameter init (matches RNNModel.init_weights + nn.LSTM defaults) ---
def init_params(key):
    keys = jax.random.split(key, 2 + 4 * NLAYERS)
    initrange = 0.1
    params = {
        "emb": jax.random.uniform(keys[0], (NTOKEN, NINP), jnp.float32,
                                  -initrange, initrange),
        # decoder weight stored pre-transposed: (NHID, NTOKEN)
        "dec_w_t": jax.random.uniform(keys[1], (NTOKEN, NHID), jnp.float32,
                                      -initrange, initrange).T,
        "dec_b": jnp.zeros((1, NTOKEN), jnp.float32),
    }
    k = 1.0 / jnp.sqrt(NHID)
    for l in range(NLAYERS):
        in_sz = NINP if l == 0 else NHID
        wih = jax.random.uniform(keys[2 + 4 * l], (4 * NHID, in_sz), jnp.float32, -k, k)
        whh = jax.random.uniform(keys[3 + 4 * l], (4 * NHID, NHID), jnp.float32, -k, k)
        b_ih = jax.random.uniform(keys[4 + 4 * l], (4 * NHID,), jnp.float32, -k, k)
        b_hh = jax.random.uniform(keys[5 + 4 * l], (4 * NHID,), jnp.float32, -k, k)
        params[f"wih{l}_t"] = wih.T                      # (in_sz, 4H)
        params[f"whh{l}_t"] = whh.T                      # (H, 4H)
        params[f"b{l}"] = (b_ih + b_hh).reshape(1, 4 * NHID)
    return params


# ---------------- pure-JAX reference (correctness guard) -------------------------------
def _reference_forward(tokens, h0, c0, params):
    hp = jax.lax.Precision.HIGHEST
    emb = jnp.take(params["emb"], tokens, axis=0)                     # (S, B, I)
    x = emb
    h_fin, c_fin = [], []
    H = NHID
    for l in range(NLAYERS):
        wih_t, whh_t, b = params[f"wih{l}_t"], params[f"whh{l}_t"], params[f"b{l}"]

        def step(carry, x_t):
            h, c = carry
            g = (jnp.dot(x_t, wih_t, precision=hp)
                 + jnp.dot(h, whh_t, precision=hp) + b)
            i_g = jax.nn.sigmoid(g[:, 0 * H:1 * H])
            f_g = jax.nn.sigmoid(g[:, 1 * H:2 * H])
            g_g = jnp.tanh(g[:, 2 * H:3 * H])
            o_g = jax.nn.sigmoid(g[:, 3 * H:4 * H])
            c_n = f_g * c + i_g * g_g
            h_n = o_g * jnp.tanh(c_n)
            return (h_n, c_n), h_n

        (hT, cT), outs = jax.lax.scan(step, (h0[l], c0[l]), x)
        x = outs
        h_fin.append(hT)
        c_fin.append(cT)
    dec = jnp.dot(x, params["dec_w_t"], precision=hp) + params["dec_b"]
    return dec, (jnp.stack(h_fin), jnp.stack(c_fin))


if __name__ == "__main__":
    key = jax.random.PRNGKey(0)
    pkey, tkey = jax.random.split(key)
    params = init_params(pkey)

    tokens = jax.random.randint(tkey, (SEQ, BATCH), 0, NTOKEN, dtype=jnp.int32)
    h0 = jnp.zeros((NLAYERS, BATCH, NHID), jnp.float32)   # model.init_hidden(bsz)
    c0 = jnp.zeros((NLAYERS, BATCH, NHID), jnp.float32)

    decoded, (hN, cN) = rnn_model_forward(tokens, h0, c0, params)
    jax.block_until_ready((decoded, hN, cN))

    assert decoded.shape == (SEQ, BATCH, NTOKEN)
    assert hN.shape == (NLAYERS, BATCH, NHID) and cN.shape == (NLAYERS, BATCH, NHID)

    # numerical check vs. pure-JAX reference
    ref_dec, (ref_h, ref_c) = _reference_forward(tokens, h0, c0, params)
    assert jnp.allclose(decoded, ref_dec, atol=1e-3, rtol=1e-3)
    assert jnp.allclose(hN, ref_h, atol=1e-3, rtol=1e-3)
    assert jnp.allclose(cN, ref_c, atol=1e-3, rtol=1e-3)

    print("KERNEL_OK")
</pallas_src>

<mosaic_0001>
module attributes {stable_mosaic.version = 11 : i64} {
  func.func @_rnn_fused_kernel(%arg0: memref<16x1xi32, #tpu.memory_space<vmem>>, %arg1: memref<128x32xf32, #tpu.memory_space<vmem>>, %arg2: memref<4x32xf32, #tpu.memory_space<vmem>>, %arg3: memref<4x32xf32, #tpu.memory_space<vmem>>, %arg4: memref<32x128xf32, #tpu.memory_space<vmem>>, %arg5: memref<32x128xf32, #tpu.memory_space<vmem>>, %arg6: memref<1x128xf32, #tpu.memory_space<vmem>>, %arg7: memref<32x128xf32, #tpu.memory_space<vmem>>, %arg8: memref<32x128xf32, #tpu.memory_space<vmem>>, %arg9: memref<1x128xf32, #tpu.memory_space<vmem>>, %arg10: memref<32x128xf32, #tpu.memory_space<vmem>>, %arg11: memref<1x128xf32, #tpu.memory_space<vmem>>, %arg12: memref<16x128xf32, #tpu.memory_space<vmem>>, %arg13: memref<4x32xf32, #tpu.memory_space<vmem>>, %arg14: memref<4x32xf32, #tpu.memory_space<vmem>>, %arg15: memref<16x32xf32, #tpu.memory_space<vmem>>, %arg16: memref<16x128xf32, #tpu.memory_space<vmem>>) attributes {dimension_semantics = [], scalar_prefetch = 0 : i64, scratch_operands = 2 : i64, tpu.core_type = #tpu.core_type<tc>} {
    %c0 = arith.constant 0 : index
    %c0_0 = arith.constant 0 : index
    %0 = vector.load %arg0[%c0, %c0_0] : memref<16x1xi32, #tpu.memory_space<vmem>>, vector<16x1xi32>
    %1 = tpu.iota {dimensions = array<i32: 1>} : vector<16x128xi32>
    %2 = vector.broadcast %0 : vector<16x1xi32> to vector<16x128xi32>
    %3 = arith.cmpi eq, %1, %2 : vector<16x128xi32>
    %4 = arith.extui %3 : vector<16x128xi1> to vector<16x128xi32>
    %5 = arith.sitofp %4 : vector<16x128xi32> to vector<16x128xf32>
    %c0_1 = arith.constant 0 : index
    %c0_2 = arith.constant 0 : index
    %6 = vector.load %arg1[%c0_1, %c0_2] : memref<128x32xf32, #tpu.memory_space<vmem>>, vector<128x32xf32>
    %cst = arith.constant dense<0.000000e+00> : vector<16x32xf32>
    %7 = tpu.matmul %5, %6, %cst {dimension_numbers = #tpu.dot_dimension_numbers<[1], [0], [0], [1], [0, 0, 1, 1], [], []>} : vector<16x128xf32>, vector<128x32xf32>, vector<16x32xf32> -> vector<16x32xf32>
    %c0_3 = arith.constant 0 : index
    %c0_4 = arith.constant 0 : index
    %8 = vector.load %arg15[%c0_3, %c0_4] : memref<16x32xf32, #tpu.memory_space<vmem>>, vector<16x32xf32>
    tpu.vector_store %arg15[%c0_3, %c0_4], %7 {strides = array<i32>} : memref<16x32xf32, #tpu.memory_space<vmem>>, vector<16x32xf32>,
    %c0_5 = arith.constant 0 : index
    %c0_6 = arith.constant 0 : index
    %9 = vector.load %arg5[%c0_5, %c0_6] : memref<32x128xf32, #tpu.memory_space<vmem>>, vector<32x128xf32>
    %c0_7 = arith.constant 0 : index
    %c0_8 = arith.constant 0 : index
    %10 = vector.load %arg15[%c0_7, %c0_8] : memref<16x32xf32, #tpu.memory_space<vmem>>, vector<16x32xf32>
    %c0_9 = arith.constant 0 : index
    %c0_10 = arith.constant 0 : index
    %11 = vector.load %arg4[%c0_9, %c0_10] : memref<32x128xf32, #tpu.memory_space<vmem>>, vector<32x128xf32>
    %cst_11 = arith.constant dense<0.000000e+00> : vector<16x128xf32>
    %12 = tpu.matmul %10, %11, %cst_11 {dimension_numbers = #tpu.dot_dimension_numbers<[1], [0], [0], [1], [0, 0, 1, 1], [], []>} : vector<16x32xf32>, vector<32x128xf32>, vector<16x128xf32> -> vector<16x128xf32>
    %c0_12 = arith.constant 0 : index
    %c0_13 = arith.constant 0 : index
    %13 = vector.load %arg6[%c0_12, %c0_13] : memref<1x128xf32, #tpu.memory_space<vmem>>, vector<1x128xf32>
    %14 = vector.broadcast %13 : vector<1x128xf32> to vector<16x128xf32>
    %15 = arith.addf %12, %14 : vector<16x128xf32>
    %c0_14 = arith.constant 0 : index
    %c0_15 = arith.constant 0 : index
    %16 = vector.load %arg16[%c0_14, %c0_15] : memref<16x128xf32, #tpu.memory_space<vmem>>, vector<16x128xf32>
    tpu.vector_store %arg16[%c0_14, %c0_15], %15 {strides = array<i32>} : memref<16x128xf32, #tpu.memory_space<vmem>>, vector<16x128xf32>,
    %c0_16 = arith.constant 0 : index
    %c0_17 = arith.constant 0 : index
    %17 = vector.load %arg2[%c0_16, %c0_17] : memref<4x32xf32, #tpu.memory_space<vmem>>, vector<2x32xf32>
    %c0_18 = arith.constant 0 : index
    %c0_19 = arith.constant 0 : index
    %18 = vector.load %arg3[%c0_18, %c0_19] : memref<4x32xf32, #tpu.memory_space<vmem>>, vector<2x32xf32>
    %c0_20 = arith.constant 0 : index
    %c0_21 = arith.constant 0 : index
    %19 = vector.load %arg16[%c0_20, %c0_21] : memref<16x128xf32, #tpu.memory_space<vmem>>, vector<2x128xf32>
    %cst_22 = arith.constant dense<0.000000e+00> : vector<2x128xf32>
    %20 = tpu.matmul %17, %9, %cst_22 {dimension_numbers = #tpu.dot_dimension_numbers<[1], [0], [0], [1], [0, 0, 1, 1], [], []>} : vector<2x32xf32>, vector<32x128xf32>, vector<2x128xf32> -> vector<2x128xf32>
    %21 = arith.addf %19, %20 : vector<2x128xf32>
    %22 = arith.negf %21 : vector<2x128xf32>
    %23 = math.exp %22 : vector<2x128xf32>
    %cst_23 = arith.constant 1.000000e+00 : f32
    %24 = vector.broadcast %cst_23 : f32 to vector<2x128xf32>
    %25 = arith.addf %24, %23 : vector<2x128xf32>
    %26 = arith.divf %24, %25 : vector<2x128xf32>
    %27 = math.tanh %21 : vector<2x128xf32>
    %28 = vector.extract_strided_slice %26 {offsets = [0, 0], sizes = [2, 32], strides = [1, 1]} : vector<2x128xf32> to vector<2x32xf32>
    %29 = vector.extract_strided_slice %26 {offsets = [0, 32], sizes = [2, 32], strides = [1, 1]} : vector<2x128xf32> to vector<2x32xf32>
    %30 = vector.extract_strided_slice %27 {offsets = [0, 64], sizes = [2, 32], strides = [1, 1]} : vector<2x128xf32> to vector<2x32xf32>
    %31 = vector.extract_strided_slice %26 {offsets = [0, 96], sizes = [2, 32], strides = [1, 1]} : vector<2x128xf32> to vector<2x32xf32>
    %32 = arith.mulf %29, %18 : vector<2x32xf32>
    %33 = arith.mulf %28, %30 : vector<2x32xf32>
    %34 = arith.addf %32, %33 : vector<2x32xf32>
    %35 = math.tanh %34 : vector<2x32xf32>
    %36 = arith.mulf %31, %35 : vector<2x32xf32>
    %c0_24 = arith.constant 0 : index
    %c0_25 = arith.constant 0 : index
    %37 = vector.load %arg15[%c0_24, %c0_25] : memref<16x32xf32, #tpu.memory_space<vmem>>, vector<2x32xf32>
    tpu.vector_store %arg15[%c0_24, %c0_25], %36 {strides = array<i32>} : memref<16x32xf32, #tpu.memory_space<vmem>>, vector<2x32xf32>,
    %c2 = arith.constant 2 : index
    %c0_26 = arith.constant 0 : index
    %38 = vector.load %arg16[%c2, %c0_26] : memref<16x128xf32, #tpu.memory_space<vmem>>, vector<2x128xf32>
    %cst_27 = arith.constant dense<0.000000e+00> : vector<2x128xf32>
    %39 = tpu.matmul %36, %9, %cst_27 {dimension_numbers = #tpu.dot_dimension_numbers<[1], [0], [0], [1], [0, 0, 1, 1], [], []>} : vector<2x32xf32>, vector<32x128xf32>, vector<2x128xf32> -> vector<2x128xf32>
    %40 = arith.addf %38, %39 : vector<2x128xf32>
    %41 = arith.negf %40 : vector<2x128xf32>
    %42 = math.exp %41 : vector<2x128xf32>
    %cst_28 = arith.constant 1.000000e+00 : f32
    %43 = vector.broadcast %cst_28 : f32 to vector<2x128xf32>
    %44 = arith.addf %43, %42 : vector<2x128xf32>
    %45 = arith.divf %43, %44 : vector<2x128xf32>
    %46 = math.tanh %40 : vector<2x128xf32>
    %47 = vector.extract_strided_slice %45 {offsets = [0, 0], sizes = [2, 32], strides = [1, 1]} : vector<2x128xf32> to vector<2x32xf32>
    %48 = vector.extract_strided_slice %45 {offsets = [0, 32], sizes = [2, 32], strides = [1, 1]} : vector<2x128xf32> to vector<2x32xf32>
    %49 = vector.extract_strided_slice %46 {offsets = [0, 64], sizes = [2, 32], strides = [1, 1]} : vector<2x128xf32> to vector<2x32xf32>
    %50 = vector.extract_strided_slice %45 {offsets = [0, 96], sizes = [2, 32], strides = [1, 1]} : vector<2x128xf32> to vector<2x32xf32>
    %51 = arith.mulf %48, %34 : vector<2x32xf32>
    %52 = arith.mulf %47, %49 : vector<2x32xf32>
    %53 = arith.addf %51, %52 : vector<2x32xf32>
    %54 = math.tanh %53 : vector<2x32xf32>
    %55 = arith.mulf %50, %54 : vector<2x32xf32>
    %c2_29 = arith.constant 2 : index
    %c0_30 = arith.constant 0 : index
    %56 = vector.load %arg15[%c2_29, %c0_30] : memref<16x32xf32, #tpu.memory_space<vmem>>, vector<2x32xf32>
    tpu.vector_store %arg15[%c2_29, %c0_30], %55 {strides = array<i32>} : memref<16x32xf32, #tpu.memory_space<vmem>>, vector<2x32xf32>,
    %c4 = arith.constant 4 : index
    %c0_31 = arith.constant 0 : index
    %57 = vector.load %arg16[%c4, %c0_31] : memref<16x128xf32, #tpu.memory_space<vmem>>, vector<2x128xf32>
    %cst_32 = arith.constant dense<0.000000e+00> : vector<2x128xf32>
    %58 = tpu.matmul %55, %9, %cst_32 {dimension_numbers = #tpu.dot_dimension_numbers<[1], [0], [0], [1], [0, 0, 1, 1], [], []>} : vector<2x32xf32>, vector<32x128xf32>, vector<2x128xf32> -> vector<2x128xf32>
    %59 = arith.addf %57, %58 : vector<2x128xf32>
    %60 = arith.negf %59 : vector<2x128xf32>
    %61 = math.exp %60 : vector<2x128xf32>
    %cst_33 = arith.constant 1.000000e+00 : f32
    %62 = vector.broadcast %cst_33 : f32 to vector<2x128xf32>
    %63 = arith.addf %62, %61 : vector<2x128xf32>
    %64 = arith.divf %62, %63 : vector<2x128xf32>
    %65 = math.tanh %59 : vector<2x128xf32>
    %66 = vector.extract_strided_slice %64 {offsets = [0, 0], sizes = [2, 32], strides = [1, 1]} : vector<2x128xf32> to vector<2x32xf32>
    %67 = vector.extract_strided_slice %64 {offsets = [0, 32], sizes = [2, 32], strides = [1, 1]} : vector<2x128xf32> to vector<2x32xf32>
    %68 = vector.extract_strided_slice %65 {offsets = [0, 64], sizes = [2, 32], strides = [1, 1]} : vector<2x128xf32> to vector<2x32xf32>
    %69 = vector.extract_strided_slice %64 {offsets = [0, 96], sizes = [2, 32], strides = [1, 1]} : vector<2x128xf32> to vector<2x32xf32>
    %70 = arith.mulf %67, %53 : vector<2x32xf32>
    %71 = arith.mulf %66, %68 : vector<2x32xf32>
    %72 = arith.addf %70, %71 : vector<2x32xf32>
    %73 = math.tanh %72 : vector<2x32xf32>
    %74 = arith.mulf %69, %73 : vector<2x32xf32>
    %c4_34 = arith.constant 4 : index
    %c0_35 = arith.constant 0 : index
    %75 = vector.load %arg15[%c4_34, %c0_35] : memref<16x32xf32, #tpu.memory_space<vmem>>, vector<2x32xf32>
    tpu.vector_store %arg15[%c4_34, %c0_35], %74 {strides = array<i32>} : memref<16x32xf32, #tpu.memory_space<vmem>>, vector<2x32xf32>,
    %c6 = arith.constant 6 : index
    %c0_36 = arith.constant 0 : index
    %76 = vector.load %arg16[%c6, %c0_36] : memref<16x128xf32, #tpu.memory_space<vmem>>, vector<2x128xf32>
    %cst_37 = arith.constant dense<0.000000e+00> : vector<2x128xf32>
    %77 = tpu.matmul %74, %9, %cst_37 {dimension_numbers = #tpu.dot_dimension_numbers<[1], [0], [0], [1], [0, 0, 1, 1], [], []>} : vector<2x32xf32>, vector<32x128xf32>, vector<2x128xf32> -> vector<2x128xf32>
    %78 = arith.addf %76, %77 : vector<2x128xf32>
    %79 = arith.negf %78 : vector<2x128xf32>
    %80 = math.exp %79 : vector<2x128xf32>
    %cst_38 = arith.constant 1.000000e+00 : f32
    %81 = vector.broadcast %cst_38 : f32 to vector<2x128xf32>
    %82 = arith.addf %81, %80 : vector<2x128xf32>
    %83 = arith.divf %81, %82 : vector<2x128xf32>
    %84 = math.tanh %78 : vector<2x128xf32>
    %85 = vector.extract_strided_slice %83 {offsets = [0, 0], sizes = [2, 32], strides = [1, 1]} : vector<2x128xf32> to vector<2x32xf32>
    %86 = vector.extract_strided_slice %83 {offsets = [0, 32], sizes = [2, 32], strides = [1, 1]} : vector<2x128xf32> to vector<2x32xf32>
    %87 = vector.extract_strided_slice %84 {offsets = [0, 64], sizes = [2, 32], strides = [1, 1]} : vector<2x128xf32> to vector<2x32xf32>
    %88 = vector.extract_strided_slice %83 {offsets = [0, 96], sizes = [2, 32], strides = [1, 1]} : vector<2x128xf32> to vector<2x32xf32>
    %89 = arith.mulf %86, %72 : vector<2x32xf32>
    %90 = arith.mulf %85, %87 : vector<2x32xf32>
    %91 = arith.addf %89, %90 : vector<2x32xf32>
    %92 = math.tanh %91 : vector<2x32xf32>
    %93 = arith.mulf %88, %92 : vector<2x32xf32>
    %c6_39 = arith.constant 6 : index
    %c0_40 = arith.constant 0 : index
    %94 = vector.load %arg15[%c6_39, %c0_40] : memref<16x32xf32, #tpu.memory_space<vmem>>, vector<2x32xf32>
    tpu.vector_store %arg15[%c6_39, %c0_40], %93 {strides = array<i32>} : memref<16x32xf32, #tpu.memory_space<vmem>>, vector<2x32xf32>,
    %c8 = arith.constant 8 : index
    %c0_41 = arith.constant 0 : index
    %95 = vector.load %arg16[%c8, %c0_41] : memref<16x128xf32, #tpu.memory_space<vmem>>, vector<2x128xf32>
    %cst_42 = arith.constant dense<0.000000e+00> : vector<2x128xf32>
    %96 = tpu.matmul %93, %9, %cst_42 {dimension_numbers = #tpu.dot_dimension_numbers<[1], [0], [0], [1], [0, 0, 1, 1], [], []>} : vector<2x32xf32>, vector<32x128xf32>, vector<2x128xf32> -> vector<2x128xf32>
    %97 = arith.addf %95, %96 : vector<2x128xf32>
    %98 = arith.negf %97 : vector<2x128xf32>
    %99 = math.exp %98 : vector<2x128xf32>
    %cst_43 = arith.constant 1.000000e+00 : f32
    %100 = vector.broadcast %cst_43 : f32 to vector<2x128xf32>
    %101 = arith.addf %100, %99 : vector<2x128xf32>
    %102 = arith.divf %100, %101 : vector<2x128xf32>
    %103 = math.tanh %97 : vector<2x128xf32>
    %104 = vector.extract_strided_slice %102 {offsets = [0, 0], sizes = [2, 32], strides = [1, 1]} : vector<2x128xf32> to vector<2x32xf32>
    %105 = vector.extract_strided_slice %102 {offsets = [0, 32], sizes = [2, 32], strides = [1, 1]} : vector<2x128xf32> to vector<2x32xf32>
    %106 = vector.extract_strided_slice %103 {offsets = [0, 64], sizes = [2, 32], strides = [1, 1]} : vector<2x128xf32> to vector<2x32xf32>
    %107 = vector.extract_strided_slice %102 {offsets = [0, 96], sizes = [2, 32], strides = [1, 1]} : vector<2x128xf32> to vector<2x32xf32>
    %108 = arith.mulf %105, %91 : vector<2x32xf32>
    %109 = arith.mulf %104, %106 : vector<2x32xf32>
    %110 = arith.addf %108, %109 : vector<2x32xf32>
    %111 = math.tanh %110 : vector<2x32xf32>
    %112 = arith.mulf %107, %111 : vector<2x32xf32>
    %c8_44 = arith.constant 8 : index
    %c0_45 = arith.constant 0 : index
    %113 = vector.load %arg15[%c8_44, %c0_45] : memref<16x32xf32, #tpu.memory_space<vmem>>, vector<2x32xf32>
    tpu.vector_store %arg15[%c8_44, %c0_45], %112 {strides = array<i32>} : memref<16x32xf32, #tpu.memory_space<vmem>>, vector<2x32xf32>,
    %c10 = arith.constant 10 : index
    %c0_46 = arith.constant 0 : index
    %114 = vector.load %arg16[%c10, %c0_46] : memref<16x128xf32, #tpu.memory_space<vmem>>, vector<2x128xf32>
    %cst_47 = arith.constant dense<0.000000e+00> : vector<2x128xf32>
    %115 = tpu.matmul %112, %9, %cst_47 {dimension_numbers = #tpu.dot_dimension_numbers<[1], [0], [0], [1], [0, 0, 1, 1], [], []>} : vector<2x32xf32>, vector<32x128xf32>, vector<2x128xf32> -> vector<2x128xf32>
    %116 = arith.addf %114, %115 : vector<2x128xf32>
    %117 = arith.negf %116 : vector<2x128xf32>
    %118 = math.exp %117 : vector<2x128xf32>
    %cst_48 = arith.constant 1.000000e+00 : f32
    %119 = vector.broadcast %cst_48 : f32 to vector<2x128xf32>
    %120 = arith.addf %119, %118 : vector<2x128xf32>
    %121 = arith.divf %119, %120 : vector<2x128xf32>
    %122 = math.tanh %116 : vector<2x128xf32>
    %123 = vector.extract_strided_slice %121 {offsets = [0, 0], sizes = [2, 32], strides = [1, 1]} : vector<2x128xf32> to vector<2x32xf32>
    %124 = vector.extract_strided_slice %121 {offsets = [0, 32], sizes = [2, 32], strides = [1, 1]} : vector<2x128xf32> to vector<2x32xf32>
    %125 = vector.extract_strided_slice %122 {offsets = [0, 64], sizes = [2, 32], strides = [1, 1]} : vector<2x128xf32> to vector<2x32xf32>
    %126 = vector.extract_strided_slice %121 {offsets = [0, 96], sizes = [2, 32], strides = [1, 1]} : vector<2x128xf32> to vector<2x32xf32>
    %127 = arith.mulf %124, %110 : vector<2x32xf32>
    %128 = arith.mulf %123, %125 : vector<2x32xf32>
    %129 = arith.addf %127, %128 : vector<2x32xf32>
    %130 = math.tanh %129 : vector<2x32xf32>
    %131 = arith.mulf %126, %130 : vector<2x32xf32>
    %c10_49 = arith.constant 10 : index
    %c0_50 = arith.constant 0 : index
    %132 = vector.load %arg15[%c10_49, %c0_50] : memref<16x32xf32, #tpu.memory_space<vmem>>, vector<2x32xf32>
    tpu.vector_store %arg15[%c10_49, %c0_50], %131 {strides = array<i32>} : memref<16x32xf32, #tpu.memory_space<vmem>>, vector<2x32xf32>,
    %c12 = arith.constant 12 : index
    %c0_51 = arith.constant 0 : index
    %133 = vector.load %arg16[%c12, %c0_51] : memref<16x128xf32, #tpu.memory_space<vmem>>, vector<2x128xf32>
    %cst_52 = arith.constant dense<0.000000e+00> : vector<2x128xf32>
    %134 = tpu.matmul %131, %9, %cst_52 {dimension_numbers = #tpu.dot_dimension_numbers<[1], [0], [0], [1], [0, 0, 1, 1], [], []>} : vector<2x32xf32>, vector<32x128xf32>, vector<2x128xf32> -> vector<2x128xf32>
    %135 = arith.addf %133, %134 : vector<2x128xf32>
    %136 = arith.negf %135 : vector<2x128xf32>
    %137 = math.exp %136 : vector<2x128xf32>
    %cst_53 = arith.constant 1.000000e+00 : f32
    %138 = vector.broadcast %cst_53 : f32 to vector<2x128xf32>
    %139 = arith.addf %138, %137 : vector<2x128xf32>
    %140 = arith.divf %138, %139 : vector<2x128xf32>
    %141 = math.tanh %135 : vector<2x128xf32>
    %142 = vector.extract_strided_slice %140 {offsets = [0, 0], sizes = [2, 32], strides = [1, 1]} : vector<2x128xf32> to vector<2x32xf32>
    %143 = vector.extract_strided_slice %140 {offsets = [0, 32], sizes = [2, 32], strides = [1, 1]} : vector<2x128xf32> to vector<2x32xf32>
    %144 = vector.extract_strided_slice %141 {offsets = [0, 64], sizes = [2, 32], strides = [1, 1]} : vector<2x128xf32> to vector<2x32xf32>
    %145 = vector.extract_strided_slice %140 {offsets = [0, 96], sizes = [2, 32], strides = [1, 1]} : vector<2x128xf32> to vector<2x32xf32>
    %146 = arith.mulf %143, %129 : vector<2x32xf32>
    %147 = arith.mulf %142, %144 : vector<2x32xf32>
    %148 = arith.addf %146, %147 : vector<2x32xf32>
    %149 = math.tanh %148 : vector<2x32xf32>
    %150 = arith.mulf %145, %149 : vector<2x32xf32>
    %c12_54 = arith.constant 12 : index
    %c0_55 = arith.constant 0 : index
    %151 = vector.load %arg15[%c12_54, %c0_55] : memref<16x32xf32, #tpu.memory_space<vmem>>, vector<2x32xf32>
    tpu.vector_store %arg15[%c12_54, %c0_55], %150 {strides = array<i32>} : memref<16x32xf32, #tpu.memory_space<vmem>>, vector<2x32xf32>,
    %c14 = arith.constant 14 : index
    %c0_56 = arith.constant 0 : index
    %152 = vector.load %arg16[%c14, %c0_56] : memref<16x128xf32, #tpu.memory_space<vmem>>, vector<2x128xf32>
    %cst_57 = arith.constant dense<0.000000e+00> : vector<2x128xf32>
    %153 = tpu.matmul %150, %9, %cst_57 {dimension_numbers = #tpu.dot_dimension_numbers<[1], [0], [0], [1], [0, 0, 1, 1], [], []>} : vector<2x32xf32>, vector<32x128xf32>, vector<2x128xf32> -> vector<2x128xf32>
    %154 = arith.addf %152, %153 : vector<2x128xf32>
    %155 = arith.negf %154 : vector<2x128xf32>
    %156 = math.exp %155 : vector<2x128xf32>
    %cst_58 = arith.constant 1.000000e+00 : f32
    %157 = vector.broadcast %cst_58 : f32 to vector<2x128xf32>
    %158 = arith.addf %157, %156 : vector<2x128xf32>
    %159 = arith.divf %157, %158 : vector<2x128xf32>
    %160 = math.tanh %154 : vector<2x128xf32>
    %161 = vector.extract_strided_slice %159 {offsets = [0, 0], sizes = [2, 32], strides = [1, 1]} : vector<2x128xf32> to vector<2x32xf32>
    %162 = vector.extract_strided_slice %159 {offsets = [0, 32], sizes = [2, 32], strides = [1, 1]} : vector<2x128xf32> to vector<2x32xf32>
    %163 = vector.extract_strided_slice %160 {offsets = [0, 64], sizes = [2, 32], strides = [1, 1]} : vector<2x128xf32> to vector<2x32xf32>
    %164 = vector.extract_strided_slice %159 {offsets = [0, 96], sizes = [2, 32], strides = [1, 1]} : vector<2x128xf32> to vector<2x32xf32>
    %165 = arith.mulf %162, %148 : vector<2x32xf32>
    %166 = arith.mulf %161, %163 : vector<2x32xf32>
    %167 = arith.addf %165, %166 : vector<2x32xf32>
    %168 = math.tanh %167 : vector<2x32xf32>
    %169 = arith.mulf %164, %168 : vector<2x32xf32>
    %c14_59 = arith.constant 14 : index
    %c0_60 = arith.constant 0 : index
    %170 = vector.load %arg15[%c14_59, %c0_60] : memref<16x32xf32, #tpu.memory_space<vmem>>, vector<2x32xf32>
    tpu.vector_store %arg15[%c14_59, %c0_60], %169 {strides = array<i32>} : memref<16x32xf32, #tpu.memory_space<vmem>>, vector<2x32xf32>,
    %c0_61 = arith.constant 0 : index
    %c0_62 = arith.constant 0 : index
    %171 = vector.load %arg13[%c0_61, %c0_62] : memref<4x32xf32, #tpu.memory_space<vmem>>, vector<2x32xf32>
    tpu.vector_store %arg13[%c0_61, %c0_62], %169 {strides = array<i32>} : memref<4x32xf32, #tpu.memory_space<vmem>>, vector<2x32xf32>,
    %c0_63 = arith.constant 0 : index
    %c0_64 = arith.constant 0 : index
    %172 = vector.load %arg14[%c0_63, %c0_64] : memref<4x32xf32, #tpu.memory_space<vmem>>, vector<2x32xf32>
    tpu.vector_store %arg14[%c0_63, %c0_64], %167 {strides = array<i32>} : memref<4x32xf32, #tpu.memory_space<vmem>>, vector<2x32xf32>,
    %c0_65 = arith.constant 0 : index
    %c0_66 = arith.constant 0 : index
    %173 = vector.load %arg8[%c0_65, %c0_66] : memref<32x128xf32, #tpu.memory_space<vmem>>, vector<32x128xf32>
    %c0_67 = arith.constant 0 : index
    %c0_68 = arith.constant 0 : index
    %174 = vector.load %arg15[%c0_67, %c0_68] : memref<16x32xf32, #tpu.memory_space<vmem>>, vector<16x32xf32>
    %c0_69 = arith.constant 0 : index
    %c0_70 = arith.constant 0 : index
    %175 = vector.load %arg7[%c0_69, %c0_70] : memref<32x128xf32, #tpu.memory_space<vmem>>, vector<32x128xf32>
    %cst_71 = arith.constant dense<0.000000e+00> : vector<16x128xf32>
    %176 = tpu.matmul %174, %175, %cst_71 {dimension_numbers = #tpu.dot_dimension_numbers<[1], [0], [0], [1], [0, 0, 1, 1], [], []>} : vector<16x32xf32>, vector<32x128xf32>, vector<16x128xf32> -> vector<16x128xf32>
    %c0_72 = arith.constant 0 : index
    %c0_73 = arith.constant 0 : index
    %177 = vector.load %arg9[%c0_72, %c0_73] : memref<1x128xf32, #tpu.memory_space<vmem>>, vector<1x128xf32>
    %178 = vector.broadcast %177 : vector<1x128xf32> to vector<16x128xf32>
    %179 = arith.addf %176, %178 : vector<16x128xf32>
    %c0_74 = arith.constant 0 : index
    %c0_75 = arith.constant 0 : index
    %180 = vector.load %arg16[%c0_74, %c0_75] : memref<16x128xf32, #tpu.memory_space<vmem>>, vector<16x128xf32>
    tpu.vector_store %arg16[%c0_74, %c0_75], %179 {strides = array<i32>} : memref<16x128xf32, #tpu.memory_space<vmem>>, vector<16x128xf32>,
    %c2_76 = arith.constant 2 : index
    %c0_77 = arith.constant 0 : index
    %181 = vector.load %arg2[%c2_76, %c0_77] : memref<4x32xf32, #tpu.memory_space<vmem>>, vector<2x32xf32>
    %c2_78 = arith.constant 2 : index
    %c0_79 = arith.constant 0 : index
    %182 = vector.load %arg3[%c2_78, %c0_79] : memref<4x32xf32, #tpu.memory_space<vmem>>, vector<2x32xf32>
    %c0_80 = arith.constant 0 : index
    %c0_81 = arith.constant 0 : index
    %183 = vector.load %arg16[%c0_80, %c0_81] : memref<16x128xf32, #tpu.memory_space<vmem>>, vector<2x128xf32>
    %cst_82 = arith.constant dense<0.000000e+00> : vector<2x128xf32>
    %184 = tpu.matmul %181, %173, %cst_82 {dimension_numbers = #tpu.dot_dimension_numbers<[1], [0], [0], [1], [0, 0, 1, 1], [], []>} : vector<2x32xf32>, vector<32x128xf32>, vector<2x128xf32> -> vector<2x128xf32>
    %185 = arith.addf %183, %184 : vector<2x128xf32>
    %186 = arith.negf %185 : vector<2x128xf32>
    %187 = math.exp %186 : vector<2x128xf32>
    %cst_83 = arith.constant 1.000000e+00 : f32
    %188 = vector.broadcast %cst_83 : f32 to vector<2x128xf32>
    %189 = arith.addf %188, %187 : vector<2x128xf32>
    %190 = arith.divf %188, %189 : vector<2x128xf32>
    %191 = math.tanh %185 : vector<2x128xf32>
    %192 = vector.extract_strided_slice %190 {offsets = [0, 0], sizes = [2, 32], strides = [1, 1]} : vector<2x128xf32> to vector<2x32xf32>
    %193 = vector.extract_strided_slice %190 {offsets = [0, 32], sizes = [2, 32], strides = [1, 1]} : vector<2x128xf32> to vector<2x32xf32>
    %194 = vector.extract_strided_slice %191 {offsets = [0, 64], sizes = [2, 32], strides = [1, 1]} : vector<2x128xf32> to vector<2x32xf32>
    %195 = vector.extract_strided_slice %190 {offsets = [0, 96], sizes = [2, 32], strides = [1, 1]} : vector<2x128xf32> to vector<2x32xf32>
    %196 = arith.mulf %193, %182 : vector<2x32xf32>
    %197 = arith.mulf %192, %194 : vector<2x32xf32>
    %198 = arith.addf %196, %197 : vector<2x32xf32>
    %199 = math.tanh %198 : vector<2x32xf32>
    %200 = arith.mulf %195, %199 : vector<2x32xf32>
    %c0_84 = arith.constant 0 : index
    %c0_85 = arith.constant 0 : index
    %201 = vector.load %arg15[%c0_84, %c0_85] : memref<16x32xf32, #tpu.memory_space<vmem>>, vector<2x32xf32>
    tpu.vector_store %arg15[%c0_84, %c0_85], %200 {strides = array<i32>} : memref<16x32xf32, #tpu.memory_space<vmem>>, vector<2x32xf32>,
    %c2_86 = arith.constant 2 : index
    %c0_87 = arith.constant 0 : index
    %202 = vector.load %arg16[%c2_86, %c0_87] : memref<16x128xf32, #tpu.memory_space<vmem>>, vector<2x128xf32>
    %cst_88 = arith.constant dense<0.000000e+00> : vector<2x128xf32>
    %203 = tpu.matmul %200, %173, %cst_88 {dimension_numbers = #tpu.dot_dimension_numbers<[1], [0], [0], [1], [0, 0, 1, 1], [], []>} : vector<2x32xf32>, vector<32x128xf32>, vector<2x128xf32> -> vector<2x128xf32>
    %204 = arith.addf %202, %203 : vector<2x128xf32>
    %205 = arith.negf %204 : vector<2x128xf32>
    %206 = math.exp %205 : vector<2x128xf32>
    %cst_89 = arith.constant 1.000000e+00 : f32
    %207 = vector.broadcast %cst_89 : f32 to vector<2x128xf32>
    %208 = arith.addf %207, %206 : vector<2x128xf32>
    %209 = arith.divf %207, %208 : vector<2x128xf32>
    %210 = math.tanh %204 : vector<2x128xf32>
    %211 = vector.extract_strided_slice %209 {offsets = [0, 0], sizes = [2, 32], strides = [1, 1]} : vector<2x128xf32> to vector<2x32xf32>
    %212 = vector.extract_strided_slice %209 {offsets = [0, 32], sizes = [2, 32], strides = [1, 1]} : vector<2x128xf32> to vector<2x32xf32>
    %213 = vector.extract_strided_slice %210 {offsets = [0, 64], sizes = [2, 32], strides = [1, 1]} : vector<2x128xf32> to vector<2x32xf32>
    %214 = vector.extract_strided_slice %209 {offsets = [0, 96], sizes = [2, 32], strides = [1, 1]} : vector<2x128xf32> to vector<2x32xf32>
    %215 = arith.mulf %212, %198 : vector<2x32xf32>
    %216 = arith.mulf %211, %213 : vector<2x32xf32>
    %217 = arith.addf %215, %216 : vector<2x32xf32>
    %218 = math.tanh %217 : vector<2x32xf32>
    %219 = arith.mulf %214, %218 : vector<2x32xf32>
    %c2_90 = arith.constant 2 : index
    %c0_91 = arith.constant 0 : index
    %220 = vector.load %arg15[%c2_90, %c0_91] : memref<16x32xf32, #tpu.memory_space<vmem>>, vector<2x32xf32>
    tpu.vector_store %arg15[%c2_90, %c0_91], %219 {strides = array<i32>} : memref<16x32xf32, #tpu.memory_space<vmem>>, vector<2x32xf32>,
    %c4_92 = arith.constant 4 : index
    %c0_93 = arith.constant 0 : index
    %221 = vector.load %arg16[%c4_92, %c0_93] : memref<16x128xf32, #tpu.memory_space<vmem>>, vector<2x128xf32>
    %cst_94 = arith.constant dense<0.000000e+00> : vector<2x128xf32>
    %222 = tpu.matmul %219, %173, %cst_94 {dimension_numbers = #tpu.dot_dimension_numbers<[1], [0], [0], [1], [0, 0, 1, 1], [], []>} : vector<2x32xf32>, vector<32x128xf32>, vector<2x128xf32> -> vector<2x128xf32>
    %223 = arith.addf %221, %222 : vector<2x128xf32>
    %224 = arith.negf %223 : vector<2x128xf32>
    %225 = math.exp %224 : vector<2x128xf32>
    %cst_95 = arith.constant 1.000000e+00 : f32
    %226 = vector.broadcast %cst_95 : f32 to vector<2x128xf32>
    %227 = arith.addf %226, %225 : vector<2x128xf32>
    %228 = arith.divf %226, %227 : vector<2x128xf32>
    %229 = math.tanh %223 : vector<2x128xf32>
    %230 = vector.extract_strided_slice %228 {offsets = [0, 0], sizes = [2, 32], strides = [1, 1]} : vector<2x128xf32> to vector<2x32xf32>
    %231 = vector.extract_strided_slice %228 {offsets = [0, 32], sizes = [2, 32], strides = [1, 1]} : vector<2x128xf32> to vector<2x32xf32>
    %232 = vector.extract_strided_slice %229 {offsets = [0, 64], sizes = [2, 32], strides = [1, 1]} : vector<2x128xf32> to vector<2x32xf32>
    %233 = vector.extract_strided_slice %228 {offsets = [0, 96], sizes = [2, 32], strides = [1, 1]} : vector<2x128xf32> to vector<2x32xf32>
    %234 = arith.mulf %231, %217 : vector<2x32xf32>
    %235 = arith.mulf %230, %232 : vector<2x32xf32>
    %236 = arith.addf %234, %235 : vector<2x32xf32>
    %237 = math.tanh %236 : vector<2x32xf32>
    %238 = arith.mulf %233, %237 : vector<2x32xf32>
    %c4_96 = arith.constant 4 : index
    %c0_97 = arith.constant 0 : index
    %239 = vector.load %arg15[%c4_96, %c0_97] : memref<16x32xf32, #tpu.memory_space<vmem>>, vector<2x32xf32>
    tpu.vector_store %arg15[%c4_96, %c0_97], %238 {strides = array<i32>} : memref<16x32xf32, #tpu.memory_space<vmem>>, vector<2x32xf32>,
    %c6_98 = arith.constant 6 : index
    %c0_99 = arith.constant 0 : index
    %240 = vector.load %arg16[%c6_98, %c0_99] : memref<16x128xf32, #tpu.memory_space<vmem>>, vector<2x128xf32>
    %cst_100 = arith.constant dense<0.000000e+00> : vector<2x128xf32>
    %241 = tpu.matmul %238, %173, %cst_100 {dimension_numbers = #tpu.dot_dimension_numbers<[1], [0], [0], [1], [0, 0, 1, 1], [], []>} : vector<2x32xf32>, vector<32x128xf32>, vector<2x128xf32> -> vector<2x128xf32>
    %242 = arith.addf %240, %241 : vector<2x128xf32>
    %243 = arith.negf %242 : vector<2x128xf32>
    %244 = math.exp %243 : vector<2x128xf32>
    %cst_101 = arith.constant 1.000000e+00 : f32
    %245 = vector.broadcast %cst_101 : f32 to vector<2x128xf32>
    %246 = arith.addf %245, %244 : vector<2x128xf32>
    %247 = arith.divf %245, %246 : vector<2x128xf32>
    %248 = math.tanh %242 : vector<2x128xf32>
    %249 = vector.extract_strided_slice %247 {offsets = [0, 0], sizes = [2, 32], strides = [1, 1]} : vector<2x128xf32> to vector<2x32xf32>
    %250 = vector.extract_strided_slice %247 {offsets = [0, 32], sizes = [2, 32], strides = [1, 1]} : vector<2x128xf32> to vector<2x32xf32>
    %251 = vector.extract_strided_slice %248 {offsets = [0, 64], sizes = [2, 32], strides = [1, 1]} : vector<2x128xf32> to vector<2x32xf32>
    %252 = vector.extract_strided_slice %247 {offsets = [0, 96], sizes = [2, 32], strides = [1, 1]} : vector<2x128xf32> to vector<2x32xf32>
    %253 = arith.mulf %250, %236 : vector<2x32xf32>
    %254 = arith.mulf %249, %251 : vector<2x32xf32>
    %255 = arith.addf %253, %254 : vector<2x32xf32>
    %256 = math.tanh %255 : vector<2x32xf32>
    %257 = arith.mulf %252, %256 : vector<2x32xf32>
    %c6_102 = arith.constant 6 : index
    %c0_103 = arith.constant 0 : index
    %258 = vector.load %arg15[%c6_102, %c0_103] : memref<16x32xf32, #tpu.memory_space<vmem>>, vector<2x32xf32>
    tpu.vector_store %arg15[%c6_102, %c0_103], %257 {strides = array<i32>} : memref<16x32xf32, #tpu.memory_space<vmem>>, vector<2x32xf32>,
    %c8_104 = arith.constant 8 : index
    %c0_105 = arith.constant 0 : index
    %259 = vector.load %arg16[%c8_104, %c0_105] : memref<16x128xf32, #tpu.memory_space<vmem>>, vector<2x128xf32>
    %cst_106 = arith.constant dense<0.000000e+00> : vector<2x128xf32>
    %260 = tpu.matmul %257, %173, %cst_106 {dimension_numbers = #tpu.dot_dimension_numbers<[1], [0], [0], [1], [0, 0, 1, 1], [], []>} : vector<2x32xf32>, vector<32x128xf32>, vector<2x128xf32> -> vector<2x128xf32>
    %261 = arith.addf %259, %260 : vector<2x128xf32>
    %262 = arith.negf %261 : vector<2x128xf32>
    %263 = math.exp %262 : vector<2x128xf32>
    %cst_107 = arith.constant 1.000000e+00 : f32
    %264 = vector.broadcast %cst_107 : f32 to vector<2x128xf32>
    %265 = arith.addf %264, %263 : vector<2x128xf32>
    %266 = arith.divf %264, %265 : vector<2x128xf32>
    %267 = math.tanh %261 : vector<2x128xf32>
    %268 = vector.extract_strided_slice %266 {offsets = [0, 0], sizes = [2, 32], strides = [1, 1]} : vector<2x128xf32> to vector<2x32xf32>
    %269 = vector.extract_strided_slice %266 {offsets = [0, 32], sizes = [2, 32], strides = [1, 1]} : vector<2x128xf32> to vector<2x32xf32>
    %270 = vector.extract_strided_slice %267 {offsets = [0, 64], sizes = [2, 32], strides = [1, 1]} : vector<2x128xf32> to vector<2x32xf32>
    %271 = vector.extract_strided_slice %266 {offsets = [0, 96], sizes = [2, 32], strides = [1, 1]} : vector<2x128xf32> to vector<2x32xf32>
    %272 = arith.mulf %269, %255 : vector<2x32xf32>
    %273 = arith.mulf %268, %270 : vector<2x32xf32>
    %274 = arith.addf %272, %273 : vector<2x32xf32>
    %275 = math.tanh %274 : vector<2x32xf32>
    %276 = arith.mulf %271, %275 : vector<2x32xf32>
    %c8_108 = arith.constant 8 : index
    %c0_109 = arith.constant 0 : index
    %277 = vector.load %arg15[%c8_108, %c0_109] : memref<16x32xf32, #tpu.memory_space<vmem>>, vector<2x32xf32>
    tpu.vector_store %arg15[%c8_108, %c0_109], %276 {strides = array<i32>} : memref<16x32xf32, #tpu.memory_space<vmem>>, vector<2x32xf32>,
    %c10_110 = arith.constant 10 : index
    %c0_111 = arith.constant 0 : index
    %278 = vector.load %arg16[%c10_110, %c0_111] : memref<16x128xf32, #tpu.memory_space<vmem>>, vector<2x128xf32>
    %cst_112 = arith.constant dense<0.000000e+00> : vector<2x128xf32>
    %279 = tpu.matmul %276, %173, %cst_112 {dimension_numbers = #tpu.dot_dimension_numbers<[1], [0], [0], [1], [0, 0, 1, 1], [], []>} : vector<2x32xf32>, vector<32x128xf32>, vector<2x128xf32> -> vector<2x128xf32>
    %280 = arith.addf %278, %279 : vector<2x128xf32>
    %281 = arith.negf %280 : vector<2x128xf32>
    %282 = math.exp %281 : vector<2x128xf32>
    %cst_113 = arith.constant 1.000000e+00 : f32
    %283 = vector.broadcast %cst_113 : f32 to vector<2x128xf32>
    %284 = arith.addf %283, %282 : vector<2x128xf32>
    %285 = arith.divf %283, %284 : vector<2x128xf32>
    %286 = math.tanh %280 : vector<2x128xf32>
    %287 = vector.extract_strided_slice %285 {offsets = [0, 0], sizes = [2, 32], strides = [1, 1]} : vector<2x128xf32> to vector<2x32xf32>
    %288 = vector.extract_strided_slice %285 {offsets = [0, 32], sizes = [2, 32], strides = [1, 1]} : vector<2x128xf32> to vector<2x32xf32>
    %289 = vector.extract_strided_slice %286 {offsets = [0, 64], sizes = [2, 32], strides = [1, 1]} : vector<2x128xf32> to vector<2x32xf32>
    %290 = vector.extract_strided_slice %285 {offsets = [0, 96], sizes = [2, 32], strides = [1, 1]} : vector<2x128xf32> to vector<2x32xf32>
    %291 = arith.mulf %288, %274 : vector<2x32xf32>
    %292 = arith.mulf %287, %289 : vector<2x32xf32>
    %293 = arith.addf %291, %292 : vector<2x32xf32>
    %294 = math.tanh %293 : vector<2x32xf32>
    %295 = arith.mulf %290, %294 : vector<2x32xf32>
    %c10_114 = arith.constant 10 : index
    %c0_115 = arith.constant 0 : index
    %296 = vector.load %arg15[%c10_114, %c0_115] : memref<16x32xf32, #tpu.memory_space<vmem>>, vector<2x32xf32>
    tpu.vector_store %arg15[%c10_114, %c0_115], %295 {strides = array<i32>} : memref<16x32xf32, #tpu.memory_space<vmem>>, vector<2x32xf32>,
    %c12_116 = arith.constant 12 : index
    %c0_117 = arith.constant 0 : index
    %297 = vector.load %arg16[%c12_116, %c0_117] : memref<16x128xf32, #tpu.memory_space<vmem>>, vector<2x128xf32>
    %cst_118 = arith.constant dense<0.000000e+00> : vector<2x128xf32>
    %298 = tpu.matmul %295, %173, %cst_118 {dimension_numbers = #tpu.dot_dimension_numbers<[1], [0], [0], [1], [0, 0, 1, 1], [], []>} : vector<2x32xf32>, vector<32x128xf32>, vector<2x128xf32> -> vector<2x128xf32>
    %299 = arith.addf %297, %298 : vector<2x128xf32>
    %300 = arith.negf %299 : vector<2x128xf32>
    %301 = math.exp %300 : vector<2x128xf32>
    %cst_119 = arith.constant 1.000000e+00 : f32
    %302 = vector.broadcast %cst_119 : f32 to vector<2x128xf32>
    %303 = arith.addf %302, %301 : vector<2x128xf32>
    %304 = arith.divf %302, %303 : vector<2x128xf32>
    %305 = math.tanh %299 : vector<2x128xf32>
    %306 = vector.extract_strided_slice %304 {offsets = [0, 0], sizes = [2, 32], strides = [1, 1]} : vector<2x128xf32> to vector<2x32xf32>
    %307 = vector.extract_strided_slice %304 {offsets = [0, 32], sizes = [2, 32], strides = [1, 1]} : vector<2x128xf32> to vector<2x32xf32>
    %308 = vector.extract_strided_slice %305 {offsets = [0, 64], sizes = [2, 32], strides = [1, 1]} : vector<2x128xf32> to vector<2x32xf32>
    %309 = vector.extract_strided_slice %304 {offsets = [0, 96], sizes = [2, 32], strides = [1, 1]} : vector<2x128xf32> to vector<2x32xf32>
    %310 = arith.mulf %307, %293 : vector<2x32xf32>
    %311 = arith.mulf %306, %308 : vector<2x32xf32>
    %312 = arith.addf %310, %311 : vector<2x32xf32>
    %313 = math.tanh %312 : vector<2x32xf32>
    %314 = arith.mulf %309, %313 : vector<2x32xf32>
    %c12_120 = arith.constant 12 : index
    %c0_121 = arith.constant 0 : index
    %315 = vector.load %arg15[%c12_120, %c0_121] : memref<16x32xf32, #tpu.memory_space<vmem>>, vector<2x32xf32>
    tpu.vector_store %arg15[%c12_120, %c0_121], %314 {strides = array<i32>} : memref<16x32xf32, #tpu.memory_space<vmem>>, vector<2x32xf32>,
    %c14_122 = arith.constant 14 : index
    %c0_123 = arith.constant 0 : index
    %316 = vector.load %arg16[%c14_122, %c0_123] : memref<16x128xf32, #tpu.memory_space<vmem>>, vector<2x128xf32>
    %cst_124 = arith.constant dense<0.000000e+00> : vector<2x128xf32>
    %317 = tpu.matmul %314, %173, %cst_124 {dimension_numbers = #tpu.dot_dimension_numbers<[1], [0], [0], [1], [0, 0, 1, 1], [], []>} : vector<2x32xf32>, vector<32x128xf32>, vector<2x128xf32> -> vector<2x128xf32>
    %318 = arith.addf %316, %317 : vector<2x128xf32>
    %319 = arith.negf %318 : vector<2x128xf32>
    %320 = math.exp %319 : vector<2x128xf32>
    %cst_125 = arith.constant 1.000000e+00 : f32
    %321 = vector.broadcast %cst_125 : f32 to vector<2x128xf32>
    %322 = arith.addf %321, %320 : vector<2x128xf32>
    %323 = arith.divf %321, %322 : vector<2x128xf32>
    %324 = math.tanh %318 : vector<2x128xf32>
    %325 = vector.extract_strided_slice %323 {offsets = [0, 0], sizes = [2, 32], strides = [1, 1]} : vector<2x128xf32> to vector<2x32xf32>
    %326 = vector.extract_strided_slice %323 {offsets = [0, 32], sizes = [2, 32], strides = [1, 1]} : vector<2x128xf32> to vector<2x32xf32>
    %327 = vector.extract_strided_slice %324 {offsets = [0, 64], sizes = [2, 32], strides = [1, 1]} : vector<2x128xf32> to vector<2x32xf32>
    %328 = vector.extract_strided_slice %323 {offsets = [0, 96], sizes = [2, 32], strides = [1, 1]} : vector<2x128xf32> to vector<2x32xf32>
    %329 = arith.mulf %326, %312 : vector<2x32xf32>
    %330 = arith.mulf %325, %327 : vector<2x32xf32>
    %331 = arith.addf %329, %330 : vector<2x32xf32>
    %332 = math.tanh %331 : vector<2x32xf32>
    %333 = arith.mulf %328, %332 : vector<2x32xf32>
    %c14_126 = arith.constant 14 : index
    %c0_127 = arith.constant 0 : index
    %334 = vector.load %arg15[%c14_126, %c0_127] : memref<16x32xf32, #tpu.memory_space<vmem>>, vector<2x32xf32>
    tpu.vector_store %arg15[%c14_126, %c0_127], %333 {strides = array<i32>} : memref<16x32xf32, #tpu.memory_space<vmem>>, vector<2x32xf32>,
    %c2_128 = arith.constant 2 : index
    %c0_129 = arith.constant 0 : index
    %335 = vector.load %arg13[%c2_128, %c0_129] : memref<4x32xf32, #tpu.memory_space<vmem>>, vector<2x32xf32>
    tpu.vector_store %arg13[%c2_128, %c0_129], %333 {strides = array<i32>} : memref<4x32xf32, #tpu.memory_space<vmem>>, vector<2x32xf32>,
    %c2_130 = arith.constant 2 : index
    %c0_131 = arith.constant 0 : index
    %336 = vector.load %arg14[%c2_130, %c0_131] : memref<4x32xf32, #tpu.memory_space<vmem>>, vector<2x32xf32>
    tpu.vector_store %arg14[%c2_130, %c0_131], %331 {strides = array<i32>} : memref<4x32xf32, #tpu.memory_space<vmem>>, vector<2x32xf32>,
    %c0_132 = arith.constant 0 : index
    %c0_133 = arith.constant 0 : index
    %337 = vector.load %arg15[%c0_132, %c0_133] : memref<16x32xf32, #tpu.memory_space<vmem>>, vector<16x32xf32>
    %c0_134 = arith.constant 0 : index
    %c0_135 = arith.constant 0 : index
    %338 = vector.load %arg10[%c0_134, %c0_135] : memref<32x128xf32, #tpu.memory_space<vmem>>, vector<32x128xf32>
    %cst_136 = arith.constant dense<0.000000e+00> : vector<16x128xf32>
    %339 = tpu.matmul %337, %338, %cst_136 {dimension_numbers = #tpu.dot_dimension_numbers<[1], [0], [0], [1], [0, 0, 1, 1], [], []>} : vector<16x32xf32>, vector<32x128xf32>, vector<16x128xf32> -> vector<16x128xf32>
    %c0_137 = arith.constant 0 : index
    %c0_138 = arith.constant 0 : index
    %340 = vector.load %arg11[%c0_137, %c0_138] : memref<1x128xf32, #tpu.memory_space<vmem>>, vector<1x128xf32>
    %341 = vector.broadcast %340 : vector<1x128xf32> to vector<16x128xf32>
    %342 = arith.addf %339, %341 : vector<16x128xf32>
    %c0_139 = arith.constant 0 : index
    %c0_140 = arith.constant 0 : index
    %343 = vector.load %arg12[%c0_139, %c0_140] : memref<16x128xf32, #tpu.memory_space<vmem>>, vector<16x128xf32>
    tpu.vector_store %arg12[%c0_139, %c0_140], %342 {strides = array<i32>} : memref<16x128xf32, #tpu.memory_space<vmem>>, vector<16x128xf32>,
    return
  }
}

</mosaic_0001>

<llo_original>
// kernel: rnn_model_forward_impl.1
$region0: #{rnn_model_forward_impl.1}
  #allocation0 [shape = 'u32[]', space=smem, size = 0x4, offset = 0x4, fixed_abs, tag = 'smem constant byte address 0x4 - core index']
  #allocation1 [shape = 'u32[144,128]{1,0:T(1,128)}', space=vmem, size = 0x12000, scoped, tag = 'internal scratch']
  #allocation2 [shape = 'f32[16,32]{1,0:T(8,128)}', space=vmem, size = 0x2000, scoped, tag = 'scratch operand']
  #allocation3 [shape = 'f32[16,128]{1,0:T(8,128)}', space=vmem, size = 0x2000, scoped, tag = 'scratch operand']
  %s0 = inlined_call_operand.vmem [shape: s32[16,1], index: 0, kind: input, shape index: {}]
  %s1 = inlined_call_operand.vmem [shape: f32[128,32], index: 1, kind: input, shape index: {}]
  %s2 = inlined_call_operand.vmem [shape: f32[4,32], index: 2, kind: input, shape index: {}]
  %s3 = inlined_call_operand.vmem [shape: f32[4,32], index: 3, kind: input, shape index: {}]
  %s4 = inlined_call_operand.vmem [shape: f32[32,128], index: 4, kind: input, shape index: {}]
  %s5 = inlined_call_operand.vmem [shape: f32[32,128], index: 5, kind: input, shape index: {}]
  %s6 = inlined_call_operand.vmem [shape: f32[1,128], index: 6, kind: input, shape index: {}]
  %s7 = inlined_call_operand.vmem [shape: f32[32,128], index: 7, kind: input, shape index: {}]
  %s8 = inlined_call_operand.vmem [shape: f32[32,128], index: 8, kind: input, shape index: {}]
  %s9 = inlined_call_operand.vmem [shape: f32[1,128], index: 9, kind: input, shape index: {}]
  %s10 = inlined_call_operand.vmem [shape: f32[32,128], index: 10, kind: input, shape index: {}]
  %s11 = inlined_call_operand.vmem [shape: f32[1,128], index: 11, kind: input, shape index: {}]
  %s12 = inlined_call_operand.hbm [shape: f32[16,128], index: 12, kind: output, shape index: {0}]
  %s13 = inlined_call_operand.hbm [shape: f32[4,32], index: 13, kind: output, shape index: {1}]
  %s14 = inlined_call_operand.hbm [shape: f32[4,32], index: 14, kind: output, shape index: {2}]
  %15 = xla_tuple %s12, %s13, %s14
  %s16 = sld [smem:[#allocation0]]
  $region74: #{rnn_model_forward_impl.1} parent=0
    _
  %s18 = ssub.s32 1, %s16
  %s19 = scalar_select 0, %s18, %s16
  $region1: #{rnn_model_forward_impl.1} parent=0
    #allocation4 [shape = 'u8[8192]{0}', space=vmem, size = 0x2000, scoped, tag = 'output window, operand 0, single buffered']
    #allocation5 [shape = 's32[1]{0}', space=sflag, size = 0x4, scoped, tag = 'scoped memory for rnn_model_forward_impl.1']
    #allocation6 [shape = 'u8[2048]{0}', space=vmem, size = 0x800, scoped, tag = 'output window, operand 1, single buffered']
    #allocation7 [shape = 's32[1]{0}', space=sflag, size = 0x4, scoped, tag = 'scoped memory for rnn_model_forward_impl.1']
    #allocation8 [shape = 'u8[2048]{0}', space=vmem, size = 0x800, scoped, tag = 'output window, operand 2, single buffered']
    %20 = vsyncpa [#allocation5], 0
    %21 = vsyncpa [#allocation7], 0
    // Predicated region
    $region2: #{rnn_model_forward_impl.1} parent=1 // pred_check
      _
    $region3: #{rnn_model_forward_impl.1} parent=1 // pred_check_branch
      %23 = sbr.rel (0) target = $region5
    $region4: #{rnn_model_forward_impl.1} parent=1 // pred_region
      _
    $region5: #{rnn_model_forward_impl.1} parent=1 // pred_fallthru
      _
    // Predicated region
    $region6: #{rnn_model_forward_impl.1} parent=1 // pred_check
      _
    $region7: #{rnn_model_forward_impl.1} parent=1 // pred_check_branch
      %25 = sbr.rel (0) target = $region9
    $region8: #{rnn_model_forward_impl.1} parent=1 // pred_region
      _
    $region9: #{rnn_model_forward_impl.1} parent=1 // pred_fallthru
      _
    // Predicated region
    $region10: #{rnn_model_forward_impl.1} parent=1 // pred_check
      _
    $region11: #{rnn_model_forward_impl.1} parent=1 // pred_check_branch
      %27 = sbr.rel (0) target = $region13
    $region12: #{rnn_model_forward_impl.1} parent=1 // pred_region
      _
    $region13: #{rnn_model_forward_impl.1} parent=1 // pred_fallthru
      _
    // Predicated region
    $region14: #{rnn_model_forward_impl.1} parent=1 // pred_check
      _
    $region15: #{rnn_model_forward_impl.1} parent=1 // pred_check_branch
      %29 = sbr.rel (0) target = $region17
    $region16: #{rnn_model_forward_impl.1} parent=1 // pred_region
      _
    $region17: #{rnn_model_forward_impl.1} parent=1 // pred_fallthru
      _
    // Predicated region
    $region18: #{rnn_model_forward_impl.1} parent=1 // pred_check
      _
    $region19: #{rnn_model_forward_impl.1} parent=1 // pred_check_branch
      %31 = sbr.rel (0) target = $region21
    $region20: #{rnn_model_forward_impl.1} parent=1 // pred_region
      _
    $region21: #{rnn_model_forward_impl.1} parent=1 // pred_fallthru
      _
    // Predicated region
    $region22: #{rnn_model_forward_impl.1} parent=1 // pred_check
      _
    $region23: #{rnn_model_forward_impl.1} parent=1 // pred_check_branch
      %33 = sbr.rel (0) target = $region25
    $region24: #{rnn_model_forward_impl.1} parent=1 // pred_region
      _
    $region25: #{rnn_model_forward_impl.1} parent=1 // pred_fallthru
      _
    // Predicated region
    $region26: #{rnn_model_forward_impl.1} parent=1 // pred_check
      _
    $region27: #{rnn_model_forward_impl.1} parent=1 // pred_check_branch
      %35 = sbr.rel (0) target = $region29
    $region28: #{rnn_model_forward_impl.1} parent=1 // pred_region
      _
    $region29: #{rnn_model_forward_impl.1} parent=1 // pred_fallthru
      _
    // Predicated region
    $region30: #{rnn_model_forward_impl.1} parent=1 // pred_check
      _
    $region31: #{rnn_model_forward_impl.1} parent=1 // pred_check_branch
      %37 = sbr.rel (0) target = $region33
    $region32: #{rnn_model_forward_impl.1} parent=1 // pred_region
      _
    $region33: #{rnn_model_forward_impl.1} parent=1 // pred_fallthru
      _
    // Predicated region
    $region34: #{rnn_model_forward_impl.1} parent=1 // pred_check
      _
    $region35: #{rnn_model_forward_impl.1} parent=1 // pred_check_branch
      %39 = sbr.rel (0) target = $region37
    $region36: #{rnn_model_forward_impl.1} parent=1 // pred_region
      _
    $region37: #{rnn_model_forward_impl.1} parent=1 // pred_fallthru
      _
    // Predicated region
    $region38: #{rnn_model_forward_impl.1} parent=1 // pred_check
      _
    $region39: #{rnn_model_forward_impl.1} parent=1 // pred_check_branch
      %41 = sbr.rel (0) target = $region41
    $region40: #{rnn_model_forward_impl.1} parent=1 // pred_region
      _
    $region41: #{rnn_model_forward_impl.1} parent=1 // pred_fallthru
      _
    // Predicated region
    $region42: #{rnn_model_forward_impl.1} parent=1 // pred_check
      _
    $region43: #{rnn_model_forward_impl.1} parent=1 // pred_check_branch
      %43 = sbr.rel (0) target = $region45
    $region44: #{rnn_model_forward_impl.1} parent=1 // pred_region
      _
    $region45: #{rnn_model_forward_impl.1} parent=1 // pred_fallthru
      _
    // Predicated region
    $region46: #{rnn_model_forward_impl.1} parent=1 // pred_check
      _
    $region47: #{rnn_model_forward_impl.1} parent=1 // pred_check_branch
      %45 = sbr.rel (0) target = $region49
    $region48: #{rnn_model_forward_impl.1} parent=1 // pred_region
      _
    $region49: #{rnn_model_forward_impl.1} parent=1 // pred_fallthru
      _
    %v46 = vld [vmem:[%s0] sm:$0xff]
    %v47 = vld [vmem:[%s0 + $0x8] sm:$0xff]
    %v48 = vlaneseq
    %v49 = vand.u32 %v48, 127
    %50 = vset.pattern.permute.xlu0 0
    %51 = vperm.xlu0 %50, %v46
    %v52 = vpop.permute.xlu0 %51
    %53 = vset.pattern.permute.xlu0 0
    %54 = vperm.xlu0 %53, %v47
    %v55 = vpop.permute.xlu0 %54
    %vm56 = vcmp.eq.s32.totalorder %v49, %v52
    %vm57 = vcmp.eq.s32.totalorder %v49, %v55
    %v58 = vsel %vm56, 1, 0
    %v59 = vsel %vm57, 1, 0
    %v60 = vcvt.s32.f32 %v58
    %v61 = vcvt.s32.f32 %v59
    %v62 = vld [vmem:[%s1] sm:$0xff]
    %v63 = vld [vmem:[%s1 + $0x8] sm:$0xff]
    %v64 = vld [vmem:[%s1 + $0x10] sm:$0xff]
    %v65 = vld [vmem:[%s1 + $0x18] sm:$0xff]
    %v66 = vld [vmem:[%s1 + $0x20] sm:$0xff]
    %v67 = vld [vmem:[%s1 + $0x28] sm:$0xff]
    %v68 = vld [vmem:[%s1 + $0x30] sm:$0xff]
    %v69 = vld [vmem:[%s1 + $0x38] sm:$0xff]
    %v70 = vld [vmem:[%s1 + $0x40] sm:$0xff]
    %v71 = vld [vmem:[%s1 + $0x48] sm:$0xff]
    %v72 = vld [vmem:[%s1 + $0x50] sm:$0xff]
    %v73 = vld [vmem:[%s1 + $0x58] sm:$0xff]
    %v74 = vld [vmem:[%s1 + $0x60] sm:$0xff]
    %v75 = vld [vmem:[%s1 + $0x68] sm:$0xff]
    %v76 = vld [vmem:[%s1 + $0x70] sm:$0xff]
    %v77 = vld [vmem:[%s1 + $0x78] sm:$0xff]
    %78 = vmatprep.subr.mxu0 0.0
    %79 = vmatpush1.msra.mxu0 %v77
    %80 = vmatprep.subr.mxu0 0.0
    %81 = vmatpush1.msra.mxu0 %v76
    %82 = vmatprep.subr.mxu0 0.0
    %83 = vmatpush1.msra.mxu0 %v75
    %84 = vmatprep.subr.mxu0 0.0
    %85 = vmatpush1.msra.mxu0 %v74
    %86 = vmatprep.subr.mxu0 0.0
    %87 = vmatpush1.msra.mxu0 %v73
    %88 = vmatprep.subr.mxu0 0.0
    %89 = vmatpush1.msra.mxu0 %v72
    %90 = vmatprep.subr.mxu0 0.0
    %91 = vmatpush1.msra.mxu0 %v71
    %92 = vmatprep.subr.mxu0 0.0
    %93 = vmatpush1.msra.mxu0 %v70
    %94 = vmatprep.subr.mxu0 0.0
    %95 = vmatpush1.msra.mxu0 %v69
    %96 = vmatprep.subr.mxu0 0.0
    %97 = vmatpush1.msra.mxu0 %v68
    %98 = vmatprep.subr.mxu0 0.0
    %99 = vmatpush1.msra.mxu0 %v67
    %100 = vmatprep.subr.mxu0 0.0
    %101 = vmatpush1.msra.mxu0 %v66
    %102 = vmatprep.subr.mxu0 0.0
    %103 = vmatpush1.msra.mxu0 %v65
    %104 = vmatprep.subr.mxu0 0.0
    %105 = vmatpush1.msra.mxu0 %v64
    %106 = vmatprep.subr.mxu0 0.0
    %107 = vmatpush1.msra.mxu0 %v63
    %108 = vmatprep.subr.mxu0 0.0
    %109 = vmatpush1.msra.mxu0 %v62
    %110 = vmatprep.subr.mxu0 0.0
    %111 = vmatpush2.msra.mxu0 0.0
    %112 = vmatprep.subr.mxu0 0.0
    %113 = vmatpush2.msra.mxu0 0.0
    %114 = vmatprep.subr.mxu0 0.0
    %115 = vmatpush2.msra.mxu0 0.0
    %116 = vmatprep.subr.mxu0 0.0
    %117 = vmatpush2.msra.mxu0 0.0
    %118 = vmatprep.subr.mxu0 0.0
    %119 = vmatpush2.msra.mxu0 0.0
    %120 = vmatprep.subr.mxu0 0.0
    %121 = vmatpush2.msra.mxu0 0.0
    %122 = vmatprep.subr.mxu0 0.0
    %123 = vmatpush2.msra.mxu0 0.0
    %124 = vmatprep.subr.mxu0 0.0
    %125 = vmatpush2.msra.mxu0 0.0
    %126 = vmatprep.subr.mxu0 0.0
    %127 = vmatpush2.msra.mxu0 0.0
    %128 = vmatprep.subr.mxu0 0.0
    %129 = vmatpush2.msra.mxu0 0.0
    %130 = vmatprep.subr.mxu0 0.0
    %131 = vmatpush2.msra.mxu0 0.0
    %132 = vmatprep.subr.mxu0 0.0
    %133 = vmatpush2.msra.mxu0 0.0
    %134 = vmatprep.subr.mxu0 0.0
    %135 = vmatpush2.msra.mxu0 0.0
    %136 = vmatprep.subr.mxu0 0.0
    %137 = vmatpush2.msra.mxu0 0.0
    %138 = vmatprep.subr.mxu0 0.0
    %139 = vmatpush2.msra.mxu0 0.0
    %140 = vmatprep.subr.mxu0 0.0
    %141 = vmatpush2.msra.mxu0 0.0
    %142 = vmatprep.mubr.f32.mxu0 0.0
    %143 = vmatmul.mubr.f32.gmra.mxu0 %v60
    %v144 = vpop.f32.mrf.mxu0
    %v145 = vadd.f32 0.0, %v144
    %v146 = vpop.f32.mrf.mxu0
    %147 = vmatprep.mubr.f32.mxu0 0.0
    %148 = vmatmul.mubr.f32.gmra.mxu0 %v61
    %v149 = vpop.f32.mrf.mxu0
    %v150 = vadd.f32 0.0, %v149
    %v151 = vpop.f32.mrf.mxu0
    %152 = vdwg.mxu0
    %vm153 = vcmask 261120
    %154 = vst.msk [vmem:[#allocation2] sm:$0xff] %vm153, %v145
    %155 = vst.msk [vmem:[#allocation2 + $0x8] sm:$0xff] %vm153, %v150
    %v156 = vld [vmem:[%s5] sm:$0xff]
    %v157 = vld [vmem:[%s5 + $0x8] sm:$0xff]
    %v158 = vld [vmem:[%s5 + $0x10] sm:$0xff]
    %v159 = vld [vmem:[%s5 + $0x18] sm:$0xff]
    %v160 = vld [vmem:[#allocation2] sm:$0xff]
    %v161 = vld [vmem:[#allocation2 + $0x8] sm:$0xff]
    %v162 = vld [vmem:[%s4] sm:$0xff]
    %v163 = vld [vmem:[%s4 + $0x8] sm:$0xff]
    %v164 = vld [vmem:[%s4 + $0x10] sm:$0xff]
    %v165 = vld [vmem:[%s4 + $0x18] sm:$0xff]
    %v166 = vld [vmem:[%s6] sm:$0x1]
    %v168 = vlaneseq
    %v169 = vshrl.u32 %v168, 7
    %v170 = vsub.s32 0, %v169
    %v171 = vrot.slane %v166, %v170
    %v174 = vsel %vm153, %v160, 0
    %v177 = vsel %vm153, %v161, 0
    %179 = vmatprep.subr.mxu0 0.0
    %180 = vmatpush1.msra.mxu0 0.0
    %181 = vmatprep.subr.mxu0 0.0
    %182 = vmatpush1.msra.mxu0 0.0
    %183 = vmatprep.subr.mxu0 0.0
    %184 = vmatpush1.msra.mxu0 0.0
    %185 = vmatprep.subr.mxu0 0.0
    %186 = vmatpush1.msra.mxu0 0.0
    %187 = vmatprep.subr.mxu0 0.0
    %188 = vmatpush1.msra.mxu0 0.0
    %189 = vmatprep.subr.mxu0 0.0
    %190 = vmatpush1.msra.mxu0 0.0
    %191 = vmatprep.subr.mxu0 0.0
    %192 = vmatpush1.msra.mxu0 0.0
    %193 = vmatprep.subr.mxu0 0.0
    %194 = vmatpush1.msra.mxu0 0.0
    %195 = vmatprep.subr.mxu0 0.0
    %196 = vmatpush1.msra.mxu0 0.0
    %197 = vmatprep.subr.mxu0 0.0
    %198 = vmatpush1.msra.mxu0 0.0
    %199 = vmatprep.subr.mxu0 0.0
    %200 = vmatpush1.msra.mxu0 0.0
    %201 = vmatprep.subr.mxu0 0.0
    %202 = vmatpush1.msra.mxu0 0.0
    %203 = vmatprep.subr.mxu0 0.0
    %204 = vmatpush1.msra.mxu0 %v165
    %205 = vmatprep.subr.mxu0 0.0
    %206 = vmatpush1.msra.mxu0 %v164
    %207 = vmatprep.subr.mxu0 0.0
    %208 = vmatpush1.msra.mxu0 %v163
    %209 = vmatprep.subr.mxu0 0.0
    %210 = vmatpush1.msra.mxu0 %v162
    %211 = vmatprep.subr.mxu0 0.0
    %212 = vmatpush2.msra.mxu0 0.0
    %213 = vmatprep.subr.mxu0 0.0
    %214 = vmatpush2.msra.mxu0 0.0
    %215 = vmatprep.subr.mxu0 0.0
    %216 = vmatpush2.msra.mxu0 0.0
    %217 = vmatprep.subr.mxu0 0.0
    %218 = vmatpush2.msra.mxu0 0.0
    %219 = vmatprep.subr.mxu0 0.0
    %220 = vmatpush2.msra.mxu0 0.0
    %221 = vmatprep.subr.mxu0 0.0
    %222 = vmatpush2.msra.mxu0 0.0
    %223 = vmatprep.subr.mxu0 0.0
    %224 = vmatpush2.msra.mxu0 0.0
    %225 = vmatprep.subr.mxu0 0.0
    %226 = vmatpush2.msra.mxu0 0.0
    %227 = vmatprep.subr.mxu0 0.0
    %228 = vmatpush2.msra.mxu0 0.0
    %229 = vmatprep.subr.mxu0 0.0
    %230 = vmatpush2.msra.mxu0 0.0
    %231 = vmatprep.subr.mxu0 0.0
    %232 = vmatpush2.msra.mxu0 0.0
    %233 = vmatprep.subr.mxu0 0.0
    %234 = vmatpush2.msra.mxu0 0.0
    %235 = vmatprep.subr.mxu0 0.0
    %236 = vmatpush2.msra.mxu0 0.0
    %237 = vmatprep.subr.mxu0 0.0
    %238 = vmatpush2.msra.mxu0 0.0
    %239 = vmatprep.subr.mxu0 0.0
    %240 = vmatpush2.msra.mxu0 0.0
    %241 = vmatprep.subr.mxu0 0.0
    %242 = vmatpush2.msra.mxu0 0.0
    %243 = vmatprep.mubr.f32.mxu0 0.0
    %244 = vmatmul.mubr.f32.gmra.mxu0 %v174
    %v245 = vpop.f32.mrf.mxu0
    %v246 = vadd.f32 %v171, %v245
    %v247 = vpop.f32.mrf.mxu0
    %248 = vmatprep.mubr.f32.mxu0 0.0
    %249 = vmatmul.mubr.f32.gmra.mxu0 %v177
    %v250 = vpop.f32.mrf.mxu0
    %v251 = vadd.f32 %v171, %v250
    %v252 = vpop.f32.mrf.mxu0
    %253 = vdwg.mxu0
    %254 = vst [vmem:[#allocation3] sm:$0xff] %v246
    %255 = vst [vmem:[#allocation3 + $0x8] sm:$0xff] %v251
    %v256 = vld [vmem:[%s2] sm:$0x3]
    %v257 = vld [vmem:[%s3] sm:$0x3]
    %v258 = vld [vmem:[#allocation3] sm:$0x3]
    %v260 = vsel %vm153, %v256, 0
    %262 = vmatprep.subr.mxu0 0.0
    %263 = vmatpush1.msra.mxu0 0.0
    %264 = vmatprep.subr.mxu0 0.0
    %265 = vmatpush1.msra.mxu0 0.0
    %266 = vmatprep.subr.mxu0 0.0
    %267 = vmatpush1.msra.mxu0 0.0
    %268 = vmatprep.subr.mxu0 0.0
    %269 = vmatpush1.msra.mxu0 0.0
    %270 = vmatprep.subr.mxu0 0.0
    %271 = vmatpush1.msra.mxu0 0.0
    %272 = vmatprep.subr.mxu0 0.0
    %273 = vmatpush1.msra.mxu0 0.0
    %274 = vmatprep.subr.mxu0 0.0
    %275 = vmatpush1.msra.mxu0 0.0
    %276 = vmatprep.subr.mxu0 0.0
    %277 = vmatpush1.msra.mxu0 0.0
    %278 = vmatprep.subr.mxu0 0.0
    %279 = vmatpush1.msra.mxu0 0.0
    %280 = vmatprep.subr.mxu0 0.0
    %281 = vmatpush1.msra.mxu0 0.0
    %282 = vmatprep.subr.mxu0 0.0
    %283 = vmatpush1.msra.mxu0 0.0
    %284 = vmatprep.subr.mxu0 0.0
    %285 = vmatpush1.msra.mxu0 0.0
    %286 = vmatprep.subr.mxu0 0.0
    %287 = vmatpush1.msra.mxu0 %v159
    %288 = vmatprep.subr.mxu0 0.0
    %289 = vmatpush1.msra.mxu0 %v158
    %290 = vmatprep.subr.mxu0 0.0
    %291 = vmatpush1.msra.mxu0 %v157
    %292 = vmatprep.subr.mxu0 0.0
    %293 = vmatpush1.msra.mxu0 %v156
    %294 = vmatprep.subr.mxu0 0.0
    %295 = vmatpush2.msra.mxu0 0.0
    %296 = vmatprep.subr.mxu0 0.0
    %297 = vmatpush2.msra.mxu0 0.0
    %298 = vmatprep.subr.mxu0 0.0
    %299 = vmatpush2.msra.mxu0 0.0
    %300 = vmatprep.subr.mxu0 0.0
    %301 = vmatpush2.msra.mxu0 0.0
    %302 = vmatprep.subr.mxu0 0.0
    %303 = vmatpush2.msra.mxu0 0.0
    %304 = vmatprep.subr.mxu0 0.0
    %305 = vmatpush2.msra.mxu0 0.0
    %306 = vmatprep.subr.mxu0 0.0
    %307 = vmatpush2.msra.mxu0 0.0
    %308 = vmatprep.subr.mxu0 0.0
    %309 = vmatpush2.msra.mxu0 0.0
    %310 = vmatprep.subr.mxu0 0.0
    %311 = vmatpush2.msra.mxu0 0.0
    %312 = vmatprep.subr.mxu0 0.0
    %313 = vmatpush2.msra.mxu0 0.0
    %314 = vmatprep.subr.mxu0 0.0
    %315 = vmatpush2.msra.mxu0 0.0
    %316 = vmatprep.subr.mxu0 0.0
    %317 = vmatpush2.msra.mxu0 0.0
    %318 = vmatprep.subr.mxu0 0.0
    %319 = vmatpush2.msra.mxu0 0.0
    %320 = vmatprep.subr.mxu0 0.0
    %321 = vmatpush2.msra.mxu0 0.0
    %322 = vmatprep.subr.mxu0 0.0
    %323 = vmatpush2.msra.mxu0 0.0
    %324 = vmatprep.subr.mxu0 0.0
    %325 = vmatpush2.msra.mxu0 0.0
    %326 = vmatprep.mubr.f32.mxu0 0.0
    %327 = vmatmul.mubr.f32.gmra.mxu0 %v260
    %v328 = vpop.f32.mrf.mxu0
    %v329 = vadd.f32 0.0, %v328
    %v330 = vpop.f32.mrf.mxu0
    %331 = vdwg.mxu0
    %v332 = vadd.f32 %v258, %v329
    %v333 = vxor.u32 %v332, 2147483648
    %v334 = vmul.f32 %v333, 1.442695
    %v335 = vpow.pop %v334
    %v336 = vadd.f32 %v335, 1.0
    %v337 = vrcp.pop %v336
    %v338 = vmul.f32 1.0, %v337
    %v339 = vtanh.pop %v332
    %341 = vrot.lane.b32.xlu0 %v257, 32
    %v342 = vpop.permute.xlu0 %341
    %v344 = vmul.f32 %v338, %v342
    %346 = vrot.lane.b32.xlu0 %v339, 64
    %v347 = vpop.permute.xlu0 %346
    %v349 = vmul.f32 %v338, %v347
    %351 = vrot.lane.b32.xlu0 %v349, 32
    %v352 = vpop.permute.xlu0 %351
    %v354 = vadd.f32 %v344, %v352
    %v355 = vtanh.pop %v354
    %357 = vrot.lane.b32.xlu0 %v355, 64
    %v358 = vpop.permute.xlu0 %357
    %v360 = vmul.f32 %v338, %v358
    %362 = vrot.lane.b32.xlu0 %v360, 32
    %v363 = vpop.permute.xlu0 %362
    %vm365 = vcmask 254976
    %366 = vst.msk [vmem:[#allocation2] sm:$0x3] %vm365, %v363
    %v367 = vld [vmem:[#allocation3 + $0x2] sm:$0x3]
    %v368 = vsel %vm153, %v363, 0
    %370 = vmatprep.subr.mxu0 0.0
    %371 = vmatpush1.msra.mxu0 0.0
    %372 = vmatprep.subr.mxu0 0.0
    %373 = vmatpush1.msra.mxu0 0.0
    %374 = vmatprep.subr.mxu0 0.0
    %375 = vmatpush1.msra.mxu0 0.0
    %376 = vmatprep.subr.mxu0 0.0
    %377 = vmatpush1.msra.mxu0 0.0
    %378 = vmatprep.subr.mxu0 0.0
    %379 = vmatpush1.msra.mxu0 0.0
    %380 = vmatprep.subr.mxu0 0.0
    %381 = vmatpush1.msra.mxu0 0.0
    %382 = vmatprep.subr.mxu0 0.0
    %383 = vmatpush1.msra.mxu0 0.0
    %384 = vmatprep.subr.mxu0 0.0
    %385 = vmatpush1.msra.mxu0 0.0
    %386 = vmatprep.subr.mxu0 0.0
    %387 = vmatpush1.msra.mxu0 0.0
    %388 = vmatprep.subr.mxu0 0.0
    %389 = vmatpush1.msra.mxu0 0.0
    %390 = vmatprep.subr.mxu0 0.0
    %391 = vmatpush1.msra.mxu0 0.0
    %392 = vmatprep.subr.mxu0 0.0
    %393 = vmatpush1.msra.mxu0 0.0
    %394 = vmatprep.subr.mxu0 0.0
    %395 = vmatpush1.msra.mxu0 %v159
    %396 = vmatprep.subr.mxu0 0.0
    %397 = vmatpush1.msra.mxu0 %v158
    %398 = vmatprep.subr.mxu0 0.0
    %399 = vmatpush1.msra.mxu0 %v157
    %400 = vmatprep.subr.mxu0 0.0
    %401 = vmatpush1.msra.mxu0 %v156
    %402 = vmatprep.subr.mxu0 0.0
    %403 = vmatpush2.msra.mxu0 0.0
    %404 = vmatprep.subr.mxu0 0.0
    %405 = vmatpush2.msra.mxu0 0.0
    %406 = vmatprep.subr.mxu0 0.0
    %407 = vmatpush2.msra.mxu0 0.0
    %408 = vmatprep.subr.mxu0 0.0
    %409 = vmatpush2.msra.mxu0 0.0
    %410 = vmatprep.subr.mxu0 0.0
    %411 = vmatpush2.msra.mxu0 0.0
    %412 = vmatprep.subr.mxu0 0.0
    %413 = vmatpush2.msra.mxu0 0.0
    %414 = vmatprep.subr.mxu0 0.0
    %415 = vmatpush2.msra.mxu0 0.0
    %416 = vmatprep.subr.mxu0 0.0
    %417 = vmatpush2.msra.mxu0 0.0
    %418 = vmatprep.subr.mxu0 0.0
    %419 = vmatpush2.msra.mxu0 0.0
    %420 = vmatprep.subr.mxu0 0.0
    %421 = vmatpush2.msra.mxu0 0.0
    %422 = vmatprep.subr.mxu0 0.0
    %423 = vmatpush2.msra.mxu0 0.0
    %424 = vmatprep.subr.mxu0 0.0
    %425 = vmatpush2.msra.mxu0 0.0
    %426 = vmatprep.subr.mxu0 0.0
    %427 = vmatpush2.msra.mxu0 0.0
    %428 = vmatprep.subr.mxu0 0.0
    %429 = vmatpush2.msra.mxu0 0.0
    %430 = vmatprep.subr.mxu0 0.0
    %431 = vmatpush2.msra.mxu0 0.0
    %432 = vmatprep.subr.mxu0 0.0
    %433 = vmatpush2.msra.mxu0 0.0
    %434 = vmatprep.mubr.f32.mxu0 0.0
    %435 = vmatmul.mubr.f32.gmra.mxu0 %v368
    %v436 = vpop.f32.mrf.mxu0
    %v437 = vadd.f32 0.0, %v436
    %v438 = vpop.f32.mrf.mxu0
    %439 = vdwg.mxu0
    %v440 = vadd.f32 %v367, %v437
    %v441 = vxor.u32 %v440, 2147483648
    %v442 = vmul.f32 %v441, 1.442695
    %v443 = vpow.pop %v442
    %v444 = vadd.f32 %v443, 1.0
    %v445 = vrcp.pop %v444
    %v446 = vmul.f32 1.0, %v445
    %v447 = vtanh.pop %v440
    %v448 = vmul.f32 %v446, %v354
    %450 = vrot.lane.b32.xlu0 %v447, 64
    %v451 = vpop.permute.xlu0 %450
    %v453 = vmul.f32 %v446, %v451
    %455 = vrot.lane.b32.xlu0 %v453, 32
    %v456 = vpop.permute.xlu0 %455
    %v458 = vadd.f32 %v448, %v456
    %v459 = vtanh.pop %v458
    %461 = vrot.lane.b32.xlu0 %v459, 64
    %v462 = vpop.permute.xlu0 %461
    %v464 = vmul.f32 %v446, %v462
    %466 = vrot.lane.b32.xlu0 %v464, 32
    %v467 = vpop.permute.xlu0 %466
    %469 = vst.msk [vmem:[#allocation2 + $0x2] sm:$0x3] %vm365, %v467
    %v470 = vld [vmem:[#allocation3 + $0x4] sm:$0x3]
    %v471 = vsel %vm153, %v467, 0
    %473 = vmatprep.subr.mxu0 0.0
    %474 = vmatpush1.msra.mxu0 0.0
    %475 = vmatprep.subr.mxu0 0.0
    %476 = vmatpush1.msra.mxu0 0.0
    %477 = vmatprep.subr.mxu0 0.0
    %478 = vmatpush1.msra.mxu0 0.0
    %479 = vmatprep.subr.mxu0 0.0
    %480 = vmatpush1.msra.mxu0 0.0
    %481 = vmatprep.subr.mxu0 0.0
    %482 = vmatpush1.msra.mxu0 0.0
    %483 = vmatprep.subr.mxu0 0.0
    %484 = vmatpush1.msra.mxu0 0.0
    %485 = vmatprep.subr.mxu0 0.0
    %486 = vmatpush1.msra.mxu0 0.0
    %487 = vmatprep.subr.mxu0 0.0
    %488 = vmatpush1.msra.mxu0 0.0
    %489 = vmatprep.subr.mxu0 0.0
    %490 = vmatpush1.msra.mxu0 0.0
    %491 = vmatprep.subr.mxu0 0.0
    %492 = vmatpush1.msra.mxu0 0.0
    %493 = vmatprep.subr.mxu0 0.0
    %494 = vmatpush1.msra.mxu0 0.0
    %495 = vmatprep.subr.mxu0 0.0
    %496 = vmatpush1.msra.mxu0 0.0
    %497 = vmatprep.subr.mxu0 0.0
    %498 = vmatpush1.msra.mxu0 %v159
    %499 = vmatprep.subr.mxu0 0.0
    %500 = vmatpush1.msra.mxu0 %v158
    %501 = vmatprep.subr.mxu0 0.0
    %502 = vmatpush1.msra.mxu0 %v157
    %503 = vmatprep.subr.mxu0 0.0
    %504 = vmatpush1.msra.mxu0 %v156
    %505 = vmatprep.subr.mxu0 0.0
    %506 = vmatpush2.msra.mxu0 0.0
    %507 = vmatprep.subr.mxu0 0.0
    %508 = vmatpush2.msra.mxu0 0.0
    %509 = vmatprep.subr.mxu0 0.0
    %510 = vmatpush2.msra.mxu0 0.0
    %511 = vmatprep.subr.mxu0 0.0
    %512 = vmatpush2.msra.mxu0 0.0
    %513 = vmatprep.subr.mxu0 0.0
    %514 = vmatpush2.msra.mxu0 0.0
    %515 = vmatprep.subr.mxu0 0.0
    %516 = vmatpush2.msra.mxu0 0.0
    %517 = vmatprep.subr.mxu0 0.0
    %518 = vmatpush2.msra.mxu0 0.0
    %519 = vmatprep.subr.mxu0 0.0
    %520 = vmatpush2.msra.mxu0 0.0
    %521 = vmatprep.subr.mxu0 0.0
    %522 = vmatpush2.msra.mxu0 0.0
    %523 = vmatprep.subr.mxu0 0.0
    %524 = vmatpush2.msra.mxu0 0.0
    %525 = vmatprep.subr.mxu0 0.0
    %526 = vmatpush2.msra.mxu0 0.0
    %527 = vmatprep.subr.mxu0 0.0
    %528 = vmatpush2.msra.mxu0 0.0
    %529 = vmatprep.subr.mxu0 0.0
    %530 = vmatpush2.msra.mxu0 0.0
    %531 = vmatprep.subr.mxu0 0.0
    %532 = vmatpush2.msra.mxu0 0.0
    %533 = vmatprep.subr.mxu0 0.0
    %534 = vmatpush2.msra.mxu0 0.0
    %535 = vmatprep.subr.mxu0 0.0
    %536 = vmatpush2.msra.mxu0 0.0
    %537 = vmatprep.mubr.f32.mxu0 0.0
    %538 = vmatmul.mubr.f32.gmra.mxu0 %v471
    %v539 = vpop.f32.mrf.mxu0
    %v540 = vadd.f32 0.0, %v539
    %v541 = vpop.f32.mrf.mxu0
    %542 = vdwg.mxu0
    %v543 = vadd.f32 %v470, %v540
    %v544 = vxor.u32 %v543, 2147483648
    %v545 = vmul.f32 %v544, 1.442695
    %v546 = vpow.pop %v545
    %v547 = vadd.f32 %v546, 1.0
    %v548 = vrcp.pop %v547
    %v549 = vmul.f32 1.0, %v548
    %v550 = vtanh.pop %v543
    %v551 = vmul.f32 %v549, %v458
    %553 = vrot.lane.b32.xlu0 %v550, 64
    %v554 = vpop.permute.xlu0 %553
    %v556 = vmul.f32 %v549, %v554
    %558 = vrot.lane.b32.xlu0 %v556, 32
    %v559 = vpop.permute.xlu0 %558
    %v561 = vadd.f32 %v551, %v559
    %v562 = vtanh.pop %v561
    %564 = vrot.lane.b32.xlu0 %v562, 64
    %v565 = vpop.permute.xlu0 %564
    %v567 = vmul.f32 %v549, %v565
    %569 = vrot.lane.b32.xlu0 %v567, 32
    %v570 = vpop.permute.xlu0 %569
    %572 = vst.msk [vmem:[#allocation2 + $0x4] sm:$0x3] %vm365, %v570
    %v573 = vld [vmem:[#allocation3 + $0x6] sm:$0x3]
    %v574 = vsel %vm153, %v570, 0
    %576 = vmatprep.subr.mxu0 0.0
    %577 = vmatpush1.msra.mxu0 0.0
    %578 = vmatprep.subr.mxu0 0.0
    %579 = vmatpush1.msra.mxu0 0.0
    %580 = vmatprep.subr.mxu0 0.0
    %581 = vmatpush1.msra.mxu0 0.0
    %582 = vmatprep.subr.mxu0 0.0
    %583 = vmatpush1.msra.mxu0 0.0
    %584 = vmatprep.subr.mxu0 0.0
    %585 = vmatpush1.msra.mxu0 0.0
    %586 = vmatprep.subr.mxu0 0.0
    %587 = vmatpush1.msra.mxu0 0.0
    %588 = vmatprep.subr.mxu0 0.0
    %589 = vmatpush1.msra.mxu0 0.0
    %590 = vmatprep.subr.mxu0 0.0
    %591 = vmatpush1.msra.mxu0 0.0
    %592 = vmatprep.subr.mxu0 0.0
    %593 = vmatpush1.msra.mxu0 0.0
    %594 = vmatprep.subr.mxu0 0.0
    %595 = vmatpush1.msra.mxu0 0.0
    %596 = vmatprep.subr.mxu0 0.0
    %597 = vmatpush1.msra.mxu0 0.0
    %598 = vmatprep.subr.mxu0 0.0
    %599 = vmatpush1.msra.mxu0 0.0
    %600 = vmatprep.subr.mxu0 0.0
    %601 = vmatpush1.msra.mxu0 %v159
    %602 = vmatprep.subr.mxu0 0.0
    %603 = vmatpush1.msra.mxu0 %v158
    %604 = vmatprep.subr.mxu0 0.0
    %605 = vmatpush1.msra.mxu0 %v157
    %606 = vmatprep.subr.mxu0 0.0
    %607 = vmatpush1.msra.mxu0 %v156
    %608 = vmatprep.subr.mxu0 0.0
    %609 = vmatpush2.msra.mxu0 0.0
    %610 = vmatprep.subr.mxu0 0.0
    %611 = vmatpush2.msra.mxu0 0.0
    %612 = vmatprep.subr.mxu0 0.0
    %613 = vmatpush2.msra.mxu0 0.0
    %614 = vmatprep.subr.mxu0 0.0
    %615 = vmatpush2.msra.mxu0 0.0
    %616 = vmatprep.subr.mxu0 0.0
    %617 = vmatpush2.msra.mxu0 0.0
    %618 = vmatprep.subr.mxu0 0.0
    %619 = vmatpush2.msra.mxu0 0.0
    %620 = vmatprep.subr.mxu0 0.0
    %621 = vmatpush2.msra.mxu0 0.0
    %622 = vmatprep.subr.mxu0 0.0
    %623 = vmatpush2.msra.mxu0 0.0
    %624 = vmatprep.subr.mxu0 0.0
    %625 = vmatpush2.msra.mxu0 0.0
    %626 = vmatprep.subr.mxu0 0.0
    %627 = vmatpush2.msra.mxu0 0.0
    %628 = vmatprep.subr.mxu0 0.0
    %629 = vmatpush2.msra.mxu0 0.0
    %630 = vmatprep.subr.mxu0 0.0
    %631 = vmatpush2.msra.mxu0 0.0
    %632 = vmatprep.subr.mxu0 0.0
    %633 = vmatpush2.msra.mxu0 0.0
    %634 = vmatprep.subr.mxu0 0.0
    %635 = vmatpush2.msra.mxu0 0.0
    %636 = vmatprep.subr.mxu0 0.0
    %637 = vmatpush2.msra.mxu0 0.0
    %638 = vmatprep.subr.mxu0 0.0
    %639 = vmatpush2.msra.mxu0 0.0
    %640 = vmatprep.mubr.f32.mxu0 0.0
    %641 = vmatmul.mubr.f32.gmra.mxu0 %v574
    %v642 = vpop.f32.mrf.mxu0
    %v643 = vadd.f32 0.0, %v642
    %v644 = vpop.f32.mrf.mxu0
    %645 = vdwg.mxu0
    %v646 = vadd.f32 %v573, %v643
    %v647 = vxor.u32 %v646, 2147483648
    %v648 = vmul.f32 %v647, 1.442695
    %v649 = vpow.pop %v648
    %v650 = vadd.f32 %v649, 1.0
    %v651 = vrcp.pop %v650
    %v652 = vmul.f32 1.0, %v651
    %v653 = vtanh.pop %v646
    %v654 = vmul.f32 %v652, %v561
    %656 = vrot.lane.b32.xlu0 %v653, 64
    %v657 = vpop.permute.xlu0 %656
    %v659 = vmul.f32 %v652, %v657
    %661 = vrot.lane.b32.xlu0 %v659, 32
    %v662 = vpop.permute.xlu0 %661
    %v664 = vadd.f32 %v654, %v662
    %v665 = vtanh.pop %v664
    %667 = vrot.lane.b32.xlu0 %v665, 64
    %v668 = vpop.permute.xlu0 %667
    %v670 = vmul.f32 %v652, %v668
    %672 = vrot.lane.b32.xlu0 %v670, 32
    %v673 = vpop.permute.xlu0 %672
    %675 = vst.msk [vmem:[#allocation2 + $0x6] sm:$0x3] %vm365, %v673
    %v676 = vld [vmem:[#allocation3 + $0x8] sm:$0x3]
    %v677 = vsel %vm153, %v673, 0
    %679 = vmatprep.subr.mxu0 0.0
    %680 = vmatpush1.msra.mxu0 0.0
    %681 = vmatprep.subr.mxu0 0.0
    %682 = vmatpush1.msra.mxu0 0.0
    %683 = vmatprep.subr.mxu0 0.0
    %684 = vmatpush1.msra.mxu0 0.0
    %685 = vmatprep.subr.mxu0 0.0
    %686 = vmatpush1.msra.mxu0 0.0
    %687 = vmatprep.subr.mxu0 0.0
    %688 = vmatpush1.msra.mxu0 0.0
    %689 = vmatprep.subr.mxu0 0.0
    %690 = vmatpush1.msra.mxu0 0.0
    %691 = vmatprep.subr.mxu0 0.0
    %692 = vmatpush1.msra.mxu0 0.0
    %693 = vmatprep.subr.mxu0 0.0
    %694 = vmatpush1.msra.mxu0 0.0
    %695 = vmatprep.subr.mxu0 0.0
    %696 = vmatpush1.msra.mxu0 0.0
    %697 = vmatprep.subr.mxu0 0.0
    %698 = vmatpush1.msra.mxu0 0.0
    %699 = vmatprep.subr.mxu0 0.0
    %700 = vmatpush1.msra.mxu0 0.0
    %701 = vmatprep.subr.mxu0 0.0
    %702 = vmatpush1.msra.mxu0 0.0
    %703 = vmatprep.subr.mxu0 0.0
    %704 = vmatpush1.msra.mxu0 %v159
    %705 = vmatprep.subr.mxu0 0.0
    %706 = vmatpush1.msra.mxu0 %v158
    %707 = vmatprep.subr.mxu0 0.0
    %708 = vmatpush1.msra.mxu0 %v157
    %709 = vmatprep.subr.mxu0 0.0
    %710 = vmatpush1.msra.mxu0 %v156
    %711 = vmatprep.subr.mxu0 0.0
    %712 = vmatpush2.msra.mxu0 0.0
    %713 = vmatprep.subr.mxu0 0.0
    %714 = vmatpush2.msra.mxu0 0.0
    %715 = vmatprep.subr.mxu0 0.0
    %716 = vmatpush2.msra.mxu0 0.0
    %717 = vmatprep.subr.mxu0 0.0
    %718 = vmatpush2.msra.mxu0 0.0
    %719 = vmatprep.subr.mxu0 0.0
    %720 = vmatpush2.msra.mxu0 0.0
    %721 = vmatprep.subr.mxu0 0.0
    %722 = vmatpush2.msra.mxu0 0.0
    %723 = vmatprep.subr.mxu0 0.0
    %724 = vmatpush2.msra.mxu0 0.0
    %725 = vmatprep.subr.mxu0 0.0
    %726 = vmatpush2.msra.mxu0 0.0
    %727 = vmatprep.subr.mxu0 0.0
    %728 = vmatpush2.msra.mxu0 0.0
    %729 = vmatprep.subr.mxu0 0.0
    %730 = vmatpush2.msra.mxu0 0.0
    %731 = vmatprep.subr.mxu0 0.0
    %732 = vmatpush2.msra.mxu0 0.0
    %733 = vmatprep.subr.mxu0 0.0
    %734 = vmatpush2.msra.mxu0 0.0
    %735 = vmatprep.subr.mxu0 0.0
    %736 = vmatpush2.msra.mxu0 0.0
    %737 = vmatprep.subr.mxu0 0.0
    %738 = vmatpush2.msra.mxu0 0.0
    %739 = vmatprep.subr.mxu0 0.0
    %740 = vmatpush2.msra.mxu0 0.0
    %741 = vmatprep.subr.mxu0 0.0
    %742 = vmatpush2.msra.mxu0 0.0
    %743 = vmatprep.mubr.f32.mxu0 0.0
    %744 = vmatmul.mubr.f32.gmra.mxu0 %v677
    %v745 = vpop.f32.mrf.mxu0
    %v746 = vadd.f32 0.0, %v745
    %v747 = vpop.f32.mrf.mxu0
    %748 = vdwg.mxu0
    %v749 = vadd.f32 %v676, %v746
    %v750 = vxor.u32 %v749, 2147483648
    %v751 = vmul.f32 %v750, 1.442695
    %v752 = vpow.pop %v751
    %v753 = vadd.f32 %v752, 1.0
    %v754 = vrcp.pop %v753
    %v755 = vmul.f32 1.0, %v754
    %v756 = vtanh.pop %v749
    %v757 = vmul.f32 %v755, %v664
    %759 = vrot.lane.b32.xlu0 %v756, 64
    %v760 = vpop.permute.xlu0 %759
    %v762 = vmul.f32 %v755, %v760
    %764 = vrot.lane.b32.xlu0 %v762, 32
    %v765 = vpop.permute.xlu0 %764
    %v767 = vadd.f32 %v757, %v765
    %v768 = vtanh.pop %v767
    %770 = vrot.lane.b32.xlu0 %v768, 64
    %v771 = vpop.permute.xlu0 %770
    %v773 = vmul.f32 %v755, %v771
    %775 = vrot.lane.b32.xlu0 %v773, 32
    %v776 = vpop.permute.xlu0 %775
    %778 = vst.msk [vmem:[#allocation2 + $0x8] sm:$0x3] %vm365, %v776
    %v779 = vld [vmem:[#allocation3 + $0xa] sm:$0x3]
    %v780 = vsel %vm153, %v776, 0
    %782 = vmatprep.subr.mxu0 0.0
    %783 = vmatpush1.msra.mxu0 0.0
    %784 = vmatprep.subr.mxu0 0.0
    %785 = vmatpush1.msra.mxu0 0.0
    %786 = vmatprep.subr.mxu0 0.0
    %787 = vmatpush1.msra.mxu0 0.0
    %788 = vmatprep.subr.mxu0 0.0
    %789 = vmatpush1.msra.mxu0 0.0
    %790 = vmatprep.subr.mxu0 0.0
    %791 = vmatpush1.msra.mxu0 0.0
    %792 = vmatprep.subr.mxu0 0.0
    %793 = vmatpush1.msra.mxu0 0.0
    %794 = vmatprep.subr.mxu0 0.0
    %795 = vmatpush1.msra.mxu0 0.0
    %796 = vmatprep.subr.mxu0 0.0
    %797 = vmatpush1.msra.mxu0 0.0
    %798 = vmatprep.subr.mxu0 0.0
    %799 = vmatpush1.msra.mxu0 0.0
    %800 = vmatprep.subr.mxu0 0.0
    %801 = vmatpush1.msra.mxu0 0.0
    %802 = vmatprep.subr.mxu0 0.0
    %803 = vmatpush1.msra.mxu0 0.0
    %804 = vmatprep.subr.mxu0 0.0
    %805 = vmatpush1.msra.mxu0 0.0
    %806 = vmatprep.subr.mxu0 0.0
    %807 = vmatpush1.msra.mxu0 %v159
    %808 = vmatprep.subr.mxu0 0.0
    %809 = vmatpush1.msra.mxu0 %v158
    %810 = vmatprep.subr.mxu0 0.0
    %811 = vmatpush1.msra.mxu0 %v157
    %812 = vmatprep.subr.mxu0 0.0
    %813 = vmatpush1.msra.mxu0 %v156
    %814 = vmatprep.subr.mxu0 0.0
    %815 = vmatpush2.msra.mxu0 0.0
    %816 = vmatprep.subr.mxu0 0.0
    %817 = vmatpush2.msra.mxu0 0.0
    %818 = vmatprep.subr.mxu0 0.0
    %819 = vmatpush2.msra.mxu0 0.0
    %820 = vmatprep.subr.mxu0 0.0
    %821 = vmatpush2.msra.mxu0 0.0
    %822 = vmatprep.subr.mxu0 0.0
    %823 = vmatpush2.msra.mxu0 0.0
    %824 = vmatprep.subr.mxu0 0.0
    %825 = vmatpush2.msra.mxu0 0.0
    %826 = vmatprep.subr.mxu0 0.0
    %827 = vmatpush2.msra.mxu0 0.0
    %828 = vmatprep.subr.mxu0 0.0
    %829 = vmatpush2.msra.mxu0 0.0
    %830 = vmatprep.subr.mxu0 0.0
    %831 = vmatpush2.msra.mxu0 0.0
    %832 = vmatprep.subr.mxu0 0.0
    %833 = vmatpush2.msra.mxu0 0.0
    %834 = vmatprep.subr.mxu0 0.0
    %835 = vmatpush2.msra.mxu0 0.0
    %836 = vmatprep.subr.mxu0 0.0
    %837 = vmatpush2.msra.mxu0 0.0
    %838 = vmatprep.subr.mxu0 0.0
    %839 = vmatpush2.msra.mxu0 0.0
    %840 = vmatprep.subr.mxu0 0.0
    %841 = vmatpush2.msra.mxu0 0.0
    %842 = vmatprep.subr.mxu0 0.0
    %843 = vmatpush2.msra.mxu0 0.0
    %844 = vmatprep.subr.mxu0 0.0
    %845 = vmatpush2.msra.mxu0 0.0
    %846 = vmatprep.mubr.f32.mxu0 0.0
    %847 = vmatmul.mubr.f32.gmra.mxu0 %v780
    %v848 = vpop.f32.mrf.mxu0
    %v849 = vadd.f32 0.0, %v848
    %v850 = vpop.f32.mrf.mxu0
    %851 = vdwg.mxu0
    %v852 = vadd.f32 %v779, %v849
    %v853 = vxor.u32 %v852, 2147483648
    %v854 = vmul.f32 %v853, 1.442695
    %v855 = vpow.pop %v854
    %v856 = vadd.f32 %v855, 1.0
    %v857 = vrcp.pop %v856
    %v858 = vmul.f32 1.0, %v857
    %v859 = vtanh.pop %v852
    %v860 = vmul.f32 %v858, %v767
    %862 = vrot.lane.b32.xlu0 %v859, 64
    %v863 = vpop.permute.xlu0 %862
    %v865 = vmul.f32 %v858, %v863
    %867 = vrot.lane.b32.xlu0 %v865, 32
    %v868 = vpop.permute.xlu0 %867
    %v870 = vadd.f32 %v860, %v868
    %v871 = vtanh.pop %v870
    %873 = vrot.lane.b32.xlu0 %v871, 64
    %v874 = vpop.permute.xlu0 %873
    %v876 = vmul.f32 %v858, %v874
    %878 = vrot.lane.b32.xlu0 %v876, 32
    %v879 = vpop.permute.xlu0 %878
    %881 = vst.msk [vmem:[#allocation2 + $0xa] sm:$0x3] %vm365, %v879
    %v882 = vld [vmem:[#allocation3 + $0xc] sm:$0x3]
    %v883 = vsel %vm153, %v879, 0
    %885 = vmatprep.subr.mxu0 0.0
    %886 = vmatpush1.msra.mxu0 0.0
    %887 = vmatprep.subr.mxu0 0.0
    %888 = vmatpush1.msra.mxu0 0.0
    %889 = vmatprep.subr.mxu0 0.0
    %890 = vmatpush1.msra.mxu0 0.0
    %891 = vmatprep.subr.mxu0 0.0
    %892 = vmatpush1.msra.mxu0 0.0
    %893 = vmatprep.subr.mxu0 0.0
    %894 = vmatpush1.msra.mxu0 0.0
    %895 = vmatprep.subr.mxu0 0.0
    %896 = vmatpush1.msra.mxu0 0.0
    %897 = vmatprep.subr.mxu0 0.0
    %898 = vmatpush1.msra.mxu0 0.0
    %899 = vmatprep.subr.mxu0 0.0
    %900 = vmatpush1.msra.mxu0 0.0
    %901 = vmatprep.subr.mxu0 0.0
    %902 = vmatpush1.msra.mxu0 0.0
    %903 = vmatprep.subr.mxu0 0.0
    %904 = vmatpush1.msra.mxu0 0.0
    %905 = vmatprep.subr.mxu0 0.0
    %906 = vmatpush1.msra.mxu0 0.0
    %907 = vmatprep.subr.mxu0 0.0
    %908 = vmatpush1.msra.mxu0 0.0
    %909 = vmatprep.subr.mxu0 0.0
    %910 = vmatpush1.msra.mxu0 %v159
    %911 = vmatprep.subr.mxu0 0.0
    %912 = vmatpush1.msra.mxu0 %v158
    %913 = vmatprep.subr.mxu0 0.0
    %914 = vmatpush1.msra.mxu0 %v157
    %915 = vmatprep.subr.mxu0 0.0
    %916 = vmatpush1.msra.mxu0 %v156
    %917 = vmatprep.subr.mxu0 0.0
    %918 = vmatpush2.msra.mxu0 0.0
    %919 = vmatprep.subr.mxu0 0.0
    %920 = vmatpush2.msra.mxu0 0.0
    %921 = vmatprep.subr.mxu0 0.0
    %922 = vmatpush2.msra.mxu0 0.0
    %923 = vmatprep.subr.mxu0 0.0
    %924 = vmatpush2.msra.mxu0 0.0
    %925 = vmatprep.subr.mxu0 0.0
    %926 = vmatpush2.msra.mxu0 0.0
    %927 = vmatprep.subr.mxu0 0.0
    %928 = vmatpush2.msra.mxu0 0.0
    %929 = vmatprep.subr.mxu0 0.0
    %930 = vmatpush2.msra.mxu0 0.0
    %931 = vmatprep.subr.mxu0 0.0
    %932 = vmatpush2.msra.mxu0 0.0
    %933 = vmatprep.subr.mxu0 0.0
    %934 = vmatpush2.msra.mxu0 0.0
    %935 = vmatprep.subr.mxu0 0.0
    %936 = vmatpush2.msra.mxu0 0.0
    %937 = vmatprep.subr.mxu0 0.0
    %938 = vmatpush2.msra.mxu0 0.0
    %939 = vmatprep.subr.mxu0 0.0
    %940 = vmatpush2.msra.mxu0 0.0
    %941 = vmatprep.subr.mxu0 0.0
    %942 = vmatpush2.msra.mxu0 0.0
    %943 = vmatprep.subr.mxu0 0.0
    %944 = vmatpush2.msra.mxu0 0.0
    %945 = vmatprep.subr.mxu0 0.0
    %946 = vmatpush2.msra.mxu0 0.0
    %947 = vmatprep.subr.mxu0 0.0
    %948 = vmatpush2.msra.mxu0 0.0
    %949 = vmatprep.mubr.f32.mxu0 0.0
    %950 = vmatmul.mubr.f32.gmra.mxu0 %v883
    %v951 = vpop.f32.mrf.mxu0
    %v952 = vadd.f32 0.0, %v951
    %v953 = vpop.f32.mrf.mxu0
    %954 = vdwg.mxu0
    %v955 = vadd.f32 %v882, %v952
    %v956 = vxor.u32 %v955, 2147483648
    %v957 = vmul.f32 %v956, 1.442695
    %v958 = vpow.pop %v957
    %v959 = vadd.f32 %v958, 1.0
    %v960 = vrcp.pop %v959
    %v961 = vmul.f32 1.0, %v960
    %v962 = vtanh.pop %v955
    %v963 = vmul.f32 %v961, %v870
    %965 = vrot.lane.b32.xlu0 %v962, 64
    %v966 = vpop.permute.xlu0 %965
    %v968 = vmul.f32 %v961, %v966
    %970 = vrot.lane.b32.xlu0 %v968, 32
    %v971 = vpop.permute.xlu0 %970
    %v973 = vadd.f32 %v963, %v971
    %v974 = vtanh.pop %v973
    %976 = vrot.lane.b32.xlu0 %v974, 64
    %v977 = vpop.permute.xlu0 %976
    %v979 = vmul.f32 %v961, %v977
    %981 = vrot.lane.b32.xlu0 %v979, 32
    %v982 = vpop.permute.xlu0 %981
    %984 = vst.msk [vmem:[#allocation2 + $0xc] sm:$0x3] %vm365, %v982
    %v985 = vld [vmem:[#allocation3 + $0xe] sm:$0x3]
    %v986 = vsel %vm153, %v982, 0
    %988 = vmatprep.subr.mxu0 0.0
    %989 = vmatpush1.msra.mxu0 0.0
    %990 = vmatprep.subr.mxu0 0.0
    %991 = vmatpush1.msra.mxu0 0.0
    %992 = vmatprep.subr.mxu0 0.0
    %993 = vmatpush1.msra.mxu0 0.0
    %994 = vmatprep.subr.mxu0 0.0
    %995 = vmatpush1.msra.mxu0 0.0
    %996 = vmatprep.subr.mxu0 0.0
    %997 = vmatpush1.msra.mxu0 0.0
    %998 = vmatprep.subr.mxu0 0.0
    %999 = vmatpush1.msra.mxu0 0.0
    %1000 = vmatprep.subr.mxu0 0.0
    %1001 = vmatpush1.msra.mxu0 0.0
    %1002 = vmatprep.subr.mxu0 0.0
    %1003 = vmatpush1.msra.mxu0 0.0
    %1004 = vmatprep.subr.mxu0 0.0
    %1005 = vmatpush1.msra.mxu0 0.0
    %1006 = vmatprep.subr.mxu0 0.0
    %1007 = vmatpush1.msra.mxu0 0.0
    %1008 = vmatprep.subr.mxu0 0.0
    %1009 = vmatpush1.msra.mxu0 0.0
    %1010 = vmatprep.subr.mxu0 0.0
    %1011 = vmatpush1.msra.mxu0 0.0
    %1012 = vmatprep.subr.mxu0 0.0
    %1013 = vmatpush1.msra.mxu0 %v159
    %1014 = vmatprep.subr.mxu0 0.0
    %1015 = vmatpush1.msra.mxu0 %v158
    %1016 = vmatprep.subr.mxu0 0.0
    %1017 = vmatpush1.msra.mxu0 %v157
    %1018 = vmatprep.subr.mxu0 0.0
    %1019 = vmatpush1.msra.mxu0 %v156
    %1020 = vmatprep.subr.mxu0 0.0
    %1021 = vmatpush2.msra.mxu0 0.0
    %1022 = vmatprep.subr.mxu0 0.0
    %1023 = vmatpush2.msra.mxu0 0.0
    %1024 = vmatprep.subr.mxu0 0.0
    %1025 = vmatpush2.msra.mxu0 0.0
    %1026 = vmatprep.subr.mxu0 0.0
    %1027 = vmatpush2.msra.mxu0 0.0
    %1028 = vmatprep.subr.mxu0 0.0
    %1029 = vmatpush2.msra.mxu0 0.0
    %1030 = vmatprep.subr.mxu0 0.0
    %1031 = vmatpush2.msra.mxu0 0.0
    %1032 = vmatprep.subr.mxu0 0.0
    %1033 = vmatpush2.msra.mxu0 0.0
    %1034 = vmatprep.subr.mxu0 0.0
    %1035 = vmatpush2.msra.mxu0 0.0
    %1036 = vmatprep.subr.mxu0 0.0
    %1037 = vmatpush2.msra.mxu0 0.0
    %1038 = vmatprep.subr.mxu0 0.0
    %1039 = vmatpush2.msra.mxu0 0.0
    %1040 = vmatprep.subr.mxu0 0.0
    %1041 = vmatpush2.msra.mxu0 0.0
    %1042 = vmatprep.subr.mxu0 0.0
    %1043 = vmatpush2.msra.mxu0 0.0
    %1044 = vmatprep.subr.mxu0 0.0
    %1045 = vmatpush2.msra.mxu0 0.0
    %1046 = vmatprep.subr.mxu0 0.0
    %1047 = vmatpush2.msra.mxu0 0.0
    %1048 = vmatprep.subr.mxu0 0.0
    %1049 = vmatpush2.msra.mxu0 0.0
    %1050 = vmatprep.subr.mxu0 0.0
    %1051 = vmatpush2.msra.mxu0 0.0
    %1052 = vmatprep.mubr.f32.mxu0 0.0
    %1053 = vmatmul.mubr.f32.gmra.mxu0 %v986
    %v1054 = vpop.f32.mrf.mxu0
    %v1055 = vadd.f32 0.0, %v1054
    %v1056 = vpop.f32.mrf.mxu0
    %1057 = vdwg.mxu0
    %v1058 = vadd.f32 %v985, %v1055
    %v1059 = vxor.u32 %v1058, 2147483648
    %v1060 = vmul.f32 %v1059, 1.442695
    %v1061 = vpow.pop %v1060
    %v1062 = vadd.f32 %v1061, 1.0
    %v1063 = vrcp.pop %v1062
    %v1064 = vmul.f32 1.0, %v1063
    %v1065 = vtanh.pop %v1058
    %v1066 = vmul.f32 %v1064, %v973
    %1068 = vrot.lane.b32.xlu0 %v1065, 64
    %v1069 = vpop.permute.xlu0 %1068
    %v1071 = vmul.f32 %v1064, %v1069
    %1073 = vrot.lane.b32.xlu0 %v1071, 32
    %v1074 = vpop.permute.xlu0 %1073
    %v1076 = vadd.f32 %v1066, %v1074
    %v1077 = vtanh.pop %v1076
    %1079 = vrot.lane.b32.xlu0 %v1077, 64
    %v1080 = vpop.permute.xlu0 %1079
    %v1082 = vmul.f32 %v1064, %v1080
    %1084 = vrot.lane.b32.xlu0 %v1082, 32
    %v1085 = vpop.permute.xlu0 %1084
    %1087 = vst.msk [vmem:[#allocation2 + $0xe] sm:$0x3] %vm365, %v1085
    %1088 = vst.msk [vmem:[#allocation6] sm:$0x3] %vm365, %v1085
    %1090 = vrot.lane.b32.xlu0 %v1076, 96
    %v1091 = vpop.permute.xlu0 %1090
    %1093 = vst.msk [vmem:[#allocation8] sm:$0x3] %vm365, %v1091
    %v1094 = vld [vmem:[%s8] sm:$0xff]
    %v1095 = vld [vmem:[%s8 + $0x8] sm:$0xff]
    %v1096 = vld [vmem:[%s8 + $0x10] sm:$0xff]
    %v1097 = vld [vmem:[%s8 + $0x18] sm:$0xff]
    %v1098 = vld [vmem:[#allocation2] sm:$0xff]
    %v1099 = vld [vmem:[#allocation2 + $0x8] sm:$0xff]
    %v1100 = vld [vmem:[%s7] sm:$0xff]
    %v1101 = vld [vmem:[%s7 + $0x8] sm:$0xff]
    %v1102 = vld [vmem:[%s7 + $0x10] sm:$0xff]
    %v1103 = vld [vmem:[%s7 + $0x18] sm:$0xff]
    %v1104 = vld [vmem:[%s9] sm:$0x1]
    %v1106 = vlaneseq
    %v1107 = vshrl.u32 %v1106, 7
    %v1108 = vsub.s32 0, %v1107
    %v1109 = vrot.slane %v1104, %v1108
    %v1112 = vsel %vm153, %v1098, 0
    %v1115 = vsel %vm153, %v1099, 0
    %1117 = vmatprep.subr.mxu0 0.0
    %1118 = vmatpush1.msra.mxu0 0.0
    %1119 = vmatprep.subr.mxu0 0.0
    %1120 = vmatpush1.msra.mxu0 0.0
    %1121 = vmatprep.subr.mxu0 0.0
    %1122 = vmatpush1.msra.mxu0 0.0
    %1123 = vmatprep.subr.mxu0 0.0
    %1124 = vmatpush1.msra.mxu0 0.0
    %1125 = vmatprep.subr.mxu0 0.0
    %1126 = vmatpush1.msra.mxu0 0.0
    %1127 = vmatprep.subr.mxu0 0.0
    %1128 = vmatpush1.msra.mxu0 0.0
    %1129 = vmatprep.subr.mxu0 0.0
    %1130 = vmatpush1.msra.mxu0 0.0
    %1131 = vmatprep.subr.mxu0 0.0
    %1132 = vmatpush1.msra.mxu0 0.0
    %1133 = vmatprep.subr.mxu0 0.0
    %1134 = vmatpush1.msra.mxu0 0.0
    %1135 = vmatprep.subr.mxu0 0.0
    %1136 = vmatpush1.msra.mxu0 0.0
    %1137 = vmatprep.subr.mxu0 0.0
    %1138 = vmatpush1.msra.mxu0 0.0
    %1139 = vmatprep.subr.mxu0 0.0
    %1140 = vmatpush1.msra.mxu0 0.0
    %1141 = vmatprep.subr.mxu0 0.0
    %1142 = vmatpush1.msra.mxu0 %v1103
    %1143 = vmatprep.subr.mxu0 0.0
    %1144 = vmatpush1.msra.mxu0 %v1102
    %1145 = vmatprep.subr.mxu0 0.0
    %1146 = vmatpush1.msra.mxu0 %v1101
    %1147 = vmatprep.subr.mxu0 0.0
    %1148 = vmatpush1.msra.mxu0 %v1100
    %1149 = vmatprep.subr.mxu0 0.0
    %1150 = vmatpush2.msra.mxu0 0.0
    %1151 = vmatprep.subr.mxu0 0.0
    %1152 = vmatpush2.msra.mxu0 0.0
    %1153 = vmatprep.subr.mxu0 0.0
    %1154 = vmatpush2.msra.mxu0 0.0
    %1155 = vmatprep.subr.mxu0 0.0
    %1156 = vmatpush2.msra.mxu0 0.0
    %1157 = vmatprep.subr.mxu0 0.0
    %1158 = vmatpush2.msra.mxu0 0.0
    %1159 = vmatprep.subr.mxu0 0.0
    %1160 = vmatpush2.msra.mxu0 0.0
    %1161 = vmatprep.subr.mxu0 0.0
    %1162 = vmatpush2.msra.mxu0 0.0
    %1163 = vmatprep.subr.mxu0 0.0
    %1164 = vmatpush2.msra.mxu0 0.0
    %1165 = vmatprep.subr.mxu0 0.0
    %1166 = vmatpush2.msra.mxu0 0.0
    %1167 = vmatprep.subr.mxu0 0.0
    %1168 = vmatpush2.msra.mxu0 0.0
    %1169 = vmatprep.subr.mxu0 0.0
    %1170 = vmatpush2.msra.mxu0 0.0
    %1171 = vmatprep.subr.mxu0 0.0
    %1172 = vmatpush2.msra.mxu0 0.0
    %1173 = vmatprep.subr.mxu0 0.0
    %1174 = vmatpush2.msra.mxu0 0.0
    %1175 = vmatprep.subr.mxu0 0.0
    %1176 = vmatpush2.msra.mxu0 0.0
    %1177 = vmatprep.subr.mxu0 0.0
    %1178 = vmatpush2.msra.mxu0 0.0
    %1179 = vmatprep.subr.mxu0 0.0
    %1180 = vmatpush2.msra.mxu0 0.0
    %1181 = vmatprep.mubr.f32.mxu0 0.0
    %1182 = vmatmul.mubr.f32.gmra.mxu0 %v1112
    %v1183 = vpop.f32.mrf.mxu0
    %v1184 = vadd.f32 %v1109, %v1183
    %v1185 = vpop.f32.mrf.mxu0
    %1186 = vmatprep.mubr.f32.mxu0 0.0
    %1187 = vmatmul.mubr.f32.gmra.mxu0 %v1115
    %v1188 = vpop.f32.mrf.mxu0
    %v1189 = vadd.f32 %v1109, %v1188
    %v1190 = vpop.f32.mrf.mxu0
    %1191 = vdwg.mxu0
    %1192 = vst [vmem:[#allocation3] sm:$0xff] %v1184
    %1193 = vst [vmem:[#allocation3 + $0x8] sm:$0xff] %v1189
    %v1194 = vld [vmem:[%s2 + $0x2] sm:$0x3]
    %v1195 = vld [vmem:[%s3 + $0x2] sm:$0x3]
    %v1196 = vld [vmem:[#allocation3] sm:$0x3]
    %v1198 = vsel %vm153, %v1194, 0
    %1200 = vmatprep.subr.mxu0 0.0
    %1201 = vmatpush1.msra.mxu0 0.0
    %1202 = vmatprep.subr.mxu0 0.0
    %1203 = vmatpush1.msra.mxu0 0.0
    %1204 = vmatprep.subr.mxu0 0.0
    %1205 = vmatpush1.msra.mxu0 0.0
    %1206 = vmatprep.subr.mxu0 0.0
    %1207 = vmatpush1.msra.mxu0 0.0
    %1208 = vmatprep.subr.mxu0 0.0
    %1209 = vmatpush1.msra.mxu0 0.0
    %1210 = vmatprep.subr.mxu0 0.0
    %1211 = vmatpush1.msra.mxu0 0.0
    %1212 = vmatprep.subr.mxu0 0.0
    %1213 = vmatpush1.msra.mxu0 0.0
    %1214 = vmatprep.subr.mxu0 0.0
    %1215 = vmatpush1.msra.mxu0 0.0
    %1216 = vmatprep.subr.mxu0 0.0
    %1217 = vmatpush1.msra.mxu0 0.0
    %1218 = vmatprep.subr.mxu0 0.0
    %1219 = vmatpush1.msra.mxu0 0.0
    %1220 = vmatprep.subr.mxu0 0.0
    %1221 = vmatpush1.msra.mxu0 0.0
    %1222 = vmatprep.subr.mxu0 0.0
    %1223 = vmatpush1.msra.mxu0 0.0
    %1224 = vmatprep.subr.mxu0 0.0
    %1225 = vmatpush1.msra.mxu0 %v1097
    %1226 = vmatprep.subr.mxu0 0.0
    %1227 = vmatpush1.msra.mxu0 %v1096
    %1228 = vmatprep.subr.mxu0 0.0
    %1229 = vmatpush1.msra.mxu0 %v1095
    %1230 = vmatprep.subr.mxu0 0.0
    %1231 = vmatpush1.msra.mxu0 %v1094
    %1232 = vmatprep.subr.mxu0 0.0
    %1233 = vmatpush2.msra.mxu0 0.0
    %1234 = vmatprep.subr.mxu0 0.0
    %1235 = vmatpush2.msra.mxu0 0.0
    %1236 = vmatprep.subr.mxu0 0.0
    %1237 = vmatpush2.msra.mxu0 0.0
    %1238 = vmatprep.subr.mxu0 0.0
    %1239 = vmatpush2.msra.mxu0 0.0
    %1240 = vmatprep.subr.mxu0 0.0
    %1241 = vmatpush2.msra.mxu0 0.0
    %1242 = vmatprep.subr.mxu0 0.0
    %1243 = vmatpush2.msra.mxu0 0.0
    %1244 = vmatprep.subr.mxu0 0.0
    %1245 = vmatpush2.msra.mxu0 0.0
    %1246 = vmatprep.subr.mxu0 0.0
    %1247 = vmatpush2.msra.mxu0 0.0
    %1248 = vmatprep.subr.mxu0 0.0
    %1249 = vmatpush2.msra.mxu0 0.0
    %1250 = vmatprep.subr.mxu0 0.0
    %1251 = vmatpush2.msra.mxu0 0.0
    %1252 = vmatprep.subr.mxu0 0.0
    %1253 = vmatpush2.msra.mxu0 0.0
    %1254 = vmatprep.subr.mxu0 0.0
    %1255 = vmatpush2.msra.mxu0 0.0
    %1256 = vmatprep.subr.mxu0 0.0
    %1257 = vmatpush2.msra.mxu0 0.0
    %1258 = vmatprep.subr.mxu0 0.0
    %1259 = vmatpush2.msra.mxu0 0.0
    %1260 = vmatprep.subr.mxu0 0.0
    %1261 = vmatpush2.msra.mxu0 0.0
    %1262 = vmatprep.subr.mxu0 0.0
    %1263 = vmatpush2.msra.mxu0 0.0
    %1264 = vmatprep.mubr.f32.mxu0 0.0
    %1265 = vmatmul.mubr.f32.gmra.mxu0 %v1198
    %v1266 = vpop.f32.mrf.mxu0
    %v1267 = vadd.f32 0.0, %v1266
    %v1268 = vpop.f32.mrf.mxu0
    %1269 = vdwg.mxu0
    %v1270 = vadd.f32 %v1196, %v1267
    %v1271 = vxor.u32 %v1270, 2147483648
    %v1272 = vmul.f32 %v1271, 1.442695
    %v1273 = vpow.pop %v1272
    %v1274 = vadd.f32 %v1273, 1.0
    %v1275 = vrcp.pop %v1274
    %v1276 = vmul.f32 1.0, %v1275
    %v1277 = vtanh.pop %v1270
    %1279 = vrot.lane.b32.xlu0 %v1195, 32
    %v1280 = vpop.permute.xlu0 %1279
    %v1282 = vmul.f32 %v1276, %v1280
    %1284 = vrot.lane.b32.xlu0 %v1277, 64
    %v1285 = vpop.permute.xlu0 %1284
    %v1287 = vmul.f32 %v1276, %v1285
    %1289 = vrot.lane.b32.xlu0 %v1287, 32
    %v1290 = vpop.permute.xlu0 %1289
    %v1292 = vadd.f32 %v1282, %v1290
    %v1293 = vtanh.pop %v1292
    %1295 = vrot.lane.b32.xlu0 %v1293, 64
    %v1296 = vpop.permute.xlu0 %1295
    %v1298 = vmul.f32 %v1276, %v1296
    %1300 = vrot.lane.b32.xlu0 %v1298, 32
    %v1301 = vpop.permute.xlu0 %1300
    %1303 = vst.msk [vmem:[#allocation2] sm:$0x3] %vm365, %v1301
    %v1304 = vld [vmem:[#allocation3 + $0x2] sm:$0x3]
    %v1305 = vsel %vm153, %v1301, 0
    %1307 = vmatprep.subr.mxu0 0.0
    %1308 = vmatpush1.msra.mxu0 0.0
    %1309 = vmatprep.subr.mxu0 0.0
    %1310 = vmatpush1.msra.mxu0 0.0
    %1311 = vmatprep.subr.mxu0 0.0
    %1312 = vmatpush1.msra.mxu0 0.0
    %1313 = vmatprep.subr.mxu0 0.0
    %1314 = vmatpush1.msra.mxu0 0.0
    %1315 = vmatprep.subr.mxu0 0.0
    %1316 = vmatpush1.msra.mxu0 0.0
    %1317 = vmatprep.subr.mxu0 0.0
    %1318 = vmatpush1.msra.mxu0 0.0
    %1319 = vmatprep.subr.mxu0 0.0
    %1320 = vmatpush1.msra.mxu0 0.0
    %1321 = vmatprep.subr.mxu0 0.0
    %1322 = vmatpush1.msra.mxu0 0.0
    %1323 = vmatprep.subr.mxu0 0.0
    %1324 = vmatpush1.msra.mxu0 0.0
    %1325 = vmatprep.subr.mxu0 0.0
    %1326 = vmatpush1.msra.mxu0 0.0
    %1327 = vmatprep.subr.mxu0 0.0
    %1328 = vmatpush1.msra.mxu0 0.0
    %1329 = vmatprep.subr.mxu0 0.0
    %1330 = vmatpush1.msra.mxu0 0.0
    %1331 = vmatprep.subr.mxu0 0.0
    %1332 = vmatpush1.msra.mxu0 %v1097
    %1333 = vmatprep.subr.mxu0 0.0
    %1334 = vmatpush1.msra.mxu0 %v1096
    %1335 = vmatprep.subr.mxu0 0.0
    %1336 = vmatpush1.msra.mxu0 %v1095
    %1337 = vmatprep.subr.mxu0 0.0
    %1338 = vmatpush1.msra.mxu0 %v1094
    %1339 = vmatprep.subr.mxu0 0.0
    %1340 = vmatpush2.msra.mxu0 0.0
    %1341 = vmatprep.subr.mxu0 0.0
    %1342 = vmatpush2.msra.mxu0 0.0
    %1343 = vmatprep.subr.mxu0 0.0
    %1344 = vmatpush2.msra.mxu0 0.0
    %1345 = vmatprep.subr.mxu0 0.0
    %1346 = vmatpush2.msra.mxu0 0.0
    %1347 = vmatprep.subr.mxu0 0.0
    %1348 = vmatpush2.msra.mxu0 0.0
    %1349 = vmatprep.subr.mxu0 0.0
    %1350 = vmatpush2.msra.mxu0 0.0
    %1351 = vmatprep.subr.mxu0 0.0
    %1352 = vmatpush2.msra.mxu0 0.0
    %1353 = vmatprep.subr.mxu0 0.0
    %1354 = vmatpush2.msra.mxu0 0.0
    %1355 = vmatprep.subr.mxu0 0.0
    %1356 = vmatpush2.msra.mxu0 0.0
    %1357 = vmatprep.subr.mxu0 0.0
    %1358 = vmatpush2.msra.mxu0 0.0
    %1359 = vmatprep.subr.mxu0 0.0
    %1360 = vmatpush2.msra.mxu0 0.0
    %1361 = vmatprep.subr.mxu0 0.0
    %1362 = vmatpush2.msra.mxu0 0.0
    %1363 = vmatprep.subr.mxu0 0.0
    %1364 = vmatpush2.msra.mxu0 0.0
    %1365 = vmatprep.subr.mxu0 0.0
    %1366 = vmatpush2.msra.mxu0 0.0
    %1367 = vmatprep.subr.mxu0 0.0
    %1368 = vmatpush2.msra.mxu0 0.0
    %1369 = vmatprep.subr.mxu0 0.0
    %1370 = vmatpush2.msra.mxu0 0.0
    %1371 = vmatprep.mubr.f32.mxu0 0.0
    %1372 = vmatmul.mubr.f32.gmra.mxu0 %v1305
    %v1373 = vpop.f32.mrf.mxu0
    %v1374 = vadd.f32 0.0, %v1373
    %v1375 = vpop.f32.mrf.mxu0
    %1376 = vdwg.mxu0
    %v1377 = vadd.f32 %v1304, %v1374
    %v1378 = vxor.u32 %v1377, 2147483648
    %v1379 = vmul.f32 %v1378, 1.442695
    %v1380 = vpow.pop %v1379
    %v1381 = vadd.f32 %v1380, 1.0
    %v1382 = vrcp.pop %v1381
    %v1383 = vmul.f32 1.0, %v1382
    %v1384 = vtanh.pop %v1377
    %v1385 = vmul.f32 %v1383, %v1292
    %1387 = vrot.lane.b32.xlu0 %v1384, 64
    %v1388 = vpop.permute.xlu0 %1387
    %v1390 = vmul.f32 %v1383, %v1388
    %1392 = vrot.lane.b32.xlu0 %v1390, 32
    %v1393 = vpop.permute.xlu0 %1392
    %v1395 = vadd.f32 %v1385, %v1393
    %v1396 = vtanh.pop %v1395
    %1398 = vrot.lane.b32.xlu0 %v1396, 64
    %v1399 = vpop.permute.xlu0 %1398
    %v1401 = vmul.f32 %v1383, %v1399
    %1403 = vrot.lane.b32.xlu0 %v1401, 32
    %v1404 = vpop.permute.xlu0 %1403
    %1406 = vst.msk [vmem:[#allocation2 + $0x2] sm:$0x3] %vm365, %v1404
    %v1407 = vld [vmem:[#allocation3 + $0x4] sm:$0x3]
    %v1408 = vsel %vm153, %v1404, 0
    %1410 = vmatprep.subr.mxu0 0.0
    %1411 = vmatpush1.msra.mxu0 0.0
    %1412 = vmatprep.subr.mxu0 0.0
    %1413 = vmatpush1.msra.mxu0 0.0
    %1414 = vmatprep.subr.mxu0 0.0
    %1415 = vmatpush1.msra.mxu0 0.0
    %1416 = vmatprep.subr.mxu0 0.0
    %1417 = vmatpush1.msra.mxu0 0.0
    %1418 = vmatprep.subr.mxu0 0.0
    %1419 = vmatpush1.msra.mxu0 0.0
    %1420 = vmatprep.subr.mxu0 0.0
    %1421 = vmatpush1.msra.mxu0 0.0
    %1422 = vmatprep.subr.mxu0 0.0
    %1423 = vmatpush1.msra.mxu0 0.0
    %1424 = vmatprep.subr.mxu0 0.0
    %1425 = vmatpush1.msra.mxu0 0.0
    %1426 = vmatprep.subr.mxu0 0.0
    %1427 = vmatpush1.msra.mxu0 0.0
    %1428 = vmatprep.subr.mxu0 0.0
    %1429 = vmatpush1.msra.mxu0 0.0
    %1430 = vmatprep.subr.mxu0 0.0
    %1431 = vmatpush1.msra.mxu0 0.0
    %1432 = vmatprep.subr.mxu0 0.0
    %1433 = vmatpush1.msra.mxu0 0.0
    %1434 = vmatprep.subr.mxu0 0.0
    %1435 = vmatpush1.msra.mxu0 %v1097
    %1436 = vmatprep.subr.mxu0 0.0
    %1437 = vmatpush1.msra.mxu0 %v1096
    %1438 = vmatprep.subr.mxu0 0.0
    %1439 = vmatpush1.msra.mxu0 %v1095
    %1440 = vmatprep.subr.mxu0 0.0
    %1441 = vmatpush1.msra.mxu0 %v1094
    %1442 = vmatprep.subr.mxu0 0.0
    %1443 = vmatpush2.msra.mxu0 0.0
    %1444 = vmatprep.subr.mxu0 0.0
    %1445 = vmatpush2.msra.mxu0 0.0
    %1446 = vmatprep.subr.mxu0 0.0
    %1447 = vmatpush2.msra.mxu0 0.0
    %1448 = vmatprep.subr.mxu0 0.0
    %1449 = vmatpush2.msra.mxu0 0.0
    %1450 = vmatprep.subr.mxu0 0.0
    %1451 = vmatpush2.msra.mxu0 0.0
    %1452 = vmatprep.subr.mxu0 0.0
    %1453 = vmatpush2.msra.mxu0 0.0
    %1454 = vmatprep.subr.mxu0 0.0
    %1455 = vmatpush2.msra.mxu0 0.0
    %1456 = vmatprep.subr.mxu0 0.0
    %1457 = vmatpush2.msra.mxu0 0.0
    %1458 = vmatprep.subr.mxu0 0.0
    %1459 = vmatpush2.msra.mxu0 0.0
    %1460 = vmatprep.subr.mxu0 0.0
    %1461 = vmatpush2.msra.mxu0 0.0
    %1462 = vmatprep.subr.mxu0 0.0
    %1463 = vmatpush2.msra.mxu0 0.0
    %1464 = vmatprep.subr.mxu0 0.0
    %1465 = vmatpush2.msra.mxu0 0.0
    %1466 = vmatprep.subr.mxu0 0.0
    %1467 = vmatpush2.msra.mxu0 0.0
    %1468 = vmatprep.subr.mxu0 0.0
    %1469 = vmatpush2.msra.mxu0 0.0
    %1470 = vmatprep.subr.mxu0 0.0
    %1471 = vmatpush2.msra.mxu0 0.0
    %1472 = vmatprep.subr.mxu0 0.0
    %1473 = vmatpush2.msra.mxu0 0.0
    %1474 = vmatprep.mubr.f32.mxu0 0.0
    %1475 = vmatmul.mubr.f32.gmra.mxu0 %v1408
    %v1476 = vpop.f32.mrf.mxu0
    %v1477 = vadd.f32 0.0, %v1476
    %v1478 = vpop.f32.mrf.mxu0
    %1479 = vdwg.mxu0
    %v1480 = vadd.f32 %v1407, %v1477
    %v1481 = vxor.u32 %v1480, 2147483648
    %v1482 = vmul.f32 %v1481, 1.442695
    %v1483 = vpow.pop %v1482
    %v1484 = vadd.f32 %v1483, 1.0
    %v1485 = vrcp.pop %v1484
    %v1486 = vmul.f32 1.0, %v1485
    %v1487 = vtanh.pop %v1480
    %v1488 = vmul.f32 %v1486, %v1395
    %1490 = vrot.lane.b32.xlu0 %v1487, 64
    %v1491 = vpop.permute.xlu0 %1490
    %v1493 = vmul.f32 %v1486, %v1491
    %1495 = vrot.lane.b32.xlu0 %v1493, 32
    %v1496 = vpop.permute.xlu0 %1495
    %v1498 = vadd.f32 %v1488, %v1496
    %v1499 = vtanh.pop %v1498
    %1501 = vrot.lane.b32.xlu0 %v1499, 64
    %v1502 = vpop.permute.xlu0 %1501
    %v1504 = vmul.f32 %v1486, %v1502
    %1506 = vrot.lane.b32.xlu0 %v1504, 32
    %v1507 = vpop.permute.xlu0 %1506
    %1509 = vst.msk [vmem:[#allocation2 + $0x4] sm:$0x3] %vm365, %v1507
    %v1510 = vld [vmem:[#allocation3 + $0x6] sm:$0x3]
    %v1511 = vsel %vm153, %v1507, 0
    %1513 = vmatprep.subr.mxu0 0.0
    %1514 = vmatpush1.msra.mxu0 0.0
    %1515 = vmatprep.subr.mxu0 0.0
    %1516 = vmatpush1.msra.mxu0 0.0
    %1517 = vmatprep.subr.mxu0 0.0
    %1518 = vmatpush1.msra.mxu0 0.0
    %1519 = vmatprep.subr.mxu0 0.0
    %1520 = vmatpush1.msra.mxu0 0.0
    %1521 = vmatprep.subr.mxu0 0.0
    %1522 = vmatpush1.msra.mxu0 0.0
    %1523 = vmatprep.subr.mxu0 0.0
    %1524 = vmatpush1.msra.mxu0 0.0
    %1525 = vmatprep.subr.mxu0 0.0
    %1526 = vmatpush1.msra.mxu0 0.0
    %1527 = vmatprep.subr.mxu0 0.0
    %1528 = vmatpush1.msra.mxu0 0.0
    %1529 = vmatprep.subr.mxu0 0.0
    %1530 = vmatpush1.msra.mxu0 0.0
    %1531 = vmatprep.subr.mxu0 0.0
    %1532 = vmatpush1.msra.mxu0 0.0
    %1533 = vmatprep.subr.mxu0 0.0
    %1534 = vmatpush1.msra.mxu0 0.0
    %1535 = vmatprep.subr.mxu0 0.0
    %1536 = vmatpush1.msra.mxu0 0.0
    %1537 = vmatprep.subr.mxu0 0.0
    %1538 = vmatpush1.msra.mxu0 %v1097
    %1539 = vmatprep.subr.mxu0 0.0
    %1540 = vmatpush1.msra.mxu0 %v1096
    %1541 = vmatprep.subr.mxu0 0.0
    %1542 = vmatpush1.msra.mxu0 %v1095
    %1543 = vmatprep.subr.mxu0 0.0
    %1544 = vmatpush1.msra.mxu0 %v1094
    %1545 = vmatprep.subr.mxu0 0.0
    %1546 = vmatpush2.msra.mxu0 0.0
    %1547 = vmatprep.subr.mxu0 0.0
    %1548 = vmatpush2.msra.mxu0 0.0
    %1549 = vmatprep.subr.mxu0 0.0
    %1550 = vmatpush2.msra.mxu0 0.0
    %1551 = vmatprep.subr.mxu0 0.0
    %1552 = vmatpush2.msra.mxu0 0.0
    %1553 = vmatprep.subr.mxu0 0.0
    %1554 = vmatpush2.msra.mxu0 0.0
    %1555 = vmatprep.subr.mxu0 0.0
    %1556 = vmatpush2.msra.mxu0 0.0
    %1557 = vmatprep.subr.mxu0 0.0
    %1558 = vmatpush2.msra.mxu0 0.0
    %1559 = vmatprep.subr.mxu0 0.0
    %1560 = vmatpush2.msra.mxu0 0.0
    %1561 = vmatprep.subr.mxu0 0.0
    %1562 = vmatpush2.msra.mxu0 0.0
    %1563 = vmatprep.subr.mxu0 0.0
    %1564 = vmatpush2.msra.mxu0 0.0
    %1565 = vmatprep.subr.mxu0 0.0
    %1566 = vmatpush2.msra.mxu0 0.0
    %1567 = vmatprep.subr.mxu0 0.0
    %1568 = vmatpush2.msra.mxu0 0.0
    %1569 = vmatprep.subr.mxu0 0.0
    %1570 = vmatpush2.msra.mxu0 0.0
    %1571 = vmatprep.subr.mxu0 0.0
    %1572 = vmatpush2.msra.mxu0 0.0
    %1573 = vmatprep.subr.mxu0 0.0
    %1574 = vmatpush2.msra.mxu0 0.0
    %1575 = vmatprep.subr.mxu0 0.0
    %1576 = vmatpush2.msra.mxu0 0.0
    %1577 = vmatprep.mubr.f32.mxu0 0.0
    %1578 = vmatmul.mubr.f32.gmra.mxu0 %v1511
    %v1579 = vpop.f32.mrf.mxu0
    %v1580 = vadd.f32 0.0, %v1579
    %v1581 = vpop.f32.mrf.mxu0
    %1582 = vdwg.mxu0
    %v1583 = vadd.f32 %v1510, %v1580
    %v1584 = vxor.u32 %v1583, 2147483648
    %v1585 = vmul.f32 %v1584, 1.442695
    %v1586 = vpow.pop %v1585
    %v1587 = vadd.f32 %v1586, 1.0
    %v1588 = vrcp.pop %v1587
    %v1589 = vmul.f32 1.0, %v1588
    %v1590 = vtanh.pop %v1583
    %v1591 = vmul.f32 %v1589, %v1498
    %1593 = vrot.lane.b32.xlu0 %v1590, 64
    %v1594 = vpop.permute.xlu0 %1593
    %v1596 = vmul.f32 %v1589, %v1594
    %1598 = vrot.lane.b32.xlu0 %v1596, 32
    %v1599 = vpop.permute.xlu0 %1598
    %v1601 = vadd.f32 %v1591, %v1599
    %v1602 = vtanh.pop %v1601
    %1604 = vrot.lane.b32.xlu0 %v1602, 64
    %v1605 = vpop.permute.xlu0 %1604
    %v1607 = vmul.f32 %v1589, %v1605
    %1609 = vrot.lane.b32.xlu0 %v1607, 32
    %v1610 = vpop.permute.xlu0 %1609
    %1612 = vst.msk [vmem:[#allocation2 + $0x6] sm:$0x3] %vm365, %v1610
    %v1613 = vld [vmem:[#allocation3 + $0x8] sm:$0x3]
    %v1614 = vsel %vm153, %v1610, 0
    %1616 = vmatprep.subr.mxu0 0.0
    %1617 = vmatpush1.msra.mxu0 0.0
    %1618 = vmatprep.subr.mxu0 0.0
    %1619 = vmatpush1.msra.mxu0 0.0
    %1620 = vmatprep.subr.mxu0 0.0
    %1621 = vmatpush1.msra.mxu0 0.0
    %1622 = vmatprep.subr.mxu0 0.0
    %1623 = vmatpush1.msra.mxu0 0.0
    %1624 = vmatprep.subr.mxu0 0.0
    %1625 = vmatpush1.msra.mxu0 0.0
    %1626 = vmatprep.subr.mxu0 0.0
    %1627 = vmatpush1.msra.mxu0 0.0
    %1628 = vmatprep.subr.mxu0 0.0
    %1629 = vmatpush1.msra.mxu0 0.0
    %1630 = vmatprep.subr.mxu0 0.0
    %1631 = vmatpush1.msra.mxu0 0.0
    %1632 = vmatprep.subr.mxu0 0.0
    %1633 = vmatpush1.msra.mxu0 0.0
    %1634 = vmatprep.subr.mxu0 0.0
    %1635 = vmatpush1.msra.mxu0 0.0
    %1636 = vmatprep.subr.mxu0 0.0
    %1637 = vmatpush1.msra.mxu0 0.0
    %1638 = vmatprep.subr.mxu0 0.0
    %1639 = vmatpush1.msra.mxu0 0.0
    %1640 = vmatprep.subr.mxu0 0.0
    %1641 = vmatpush1.msra.mxu0 %v1097
    %1642 = vmatprep.subr.mxu0 0.0
    %1643 = vmatpush1.msra.mxu0 %v1096
    %1644 = vmatprep.subr.mxu0 0.0
    %1645 = vmatpush1.msra.mxu0 %v1095
    %1646 = vmatprep.subr.mxu0 0.0
    %1647 = vmatpush1.msra.mxu0 %v1094
    %1648 = vmatprep.subr.mxu0 0.0
    %1649 = vmatpush2.msra.mxu0 0.0
    %1650 = vmatprep.subr.mxu0 0.0
    %1651 = vmatpush2.msra.mxu0 0.0
    %1652 = vmatprep.subr.mxu0 0.0
    %1653 = vmatpush2.msra.mxu0 0.0
    %1654 = vmatprep.subr.mxu0 0.0
    %1655 = vmatpush2.msra.mxu0 0.0
    %1656 = vmatprep.subr.mxu0 0.0
    %1657 = vmatpush2.msra.mxu0 0.0
    %1658 = vmatprep.subr.mxu0 0.0
    %1659 = vmatpush2.msra.mxu0 0.0
    %1660 = vmatprep.subr.mxu0 0.0
    %1661 = vmatpush2.msra.mxu0 0.0
    %1662 = vmatprep.subr.mxu0 0.0
    %1663 = vmatpush2.msra.mxu0 0.0
    %1664 = vmatprep.subr.mxu0 0.0
    %1665 = vmatpush2.msra.mxu0 0.0
    %1666 = vmatprep.subr.mxu0 0.0
    %1667 = vmatpush2.msra.mxu0 0.0
    %1668 = vmatprep.subr.mxu0 0.0
    %1669 = vmatpush2.msra.mxu0 0.0
    %1670 = vmatprep.subr.mxu0 0.0
    %1671 = vmatpush2.msra.mxu0 0.0
    %1672 = vmatprep.subr.mxu0 0.0
    %1673 = vmatpush2.msra.mxu0 0.0
    %1674 = vmatprep.subr.mxu0 0.0
    %1675 = vmatpush2.msra.mxu0 0.0
    %1676 = vmatprep.subr.mxu0 0.0
    %1677 = vmatpush2.msra.mxu0 0.0
    %1678 = vmatprep.subr.mxu0 0.0
    %1679 = vmatpush2.msra.mxu0 0.0
    %1680 = vmatprep.mubr.f32.mxu0 0.0
    %1681 = vmatmul.mubr.f32.gmra.mxu0 %v1614
    %v1682 = vpop.f32.mrf.mxu0
    %v1683 = vadd.f32 0.0, %v1682
    %v1684 = vpop.f32.mrf.mxu0
    %1685 = vdwg.mxu0
    %v1686 = vadd.f32 %v1613, %v1683
    %v1687 = vxor.u32 %v1686, 2147483648
    %v1688 = vmul.f32 %v1687, 1.442695
    %v1689 = vpow.pop %v1688
    %v1690 = vadd.f32 %v1689, 1.0
    %v1691 = vrcp.pop %v1690
    %v1692 = vmul.f32 1.0, %v1691
    %v1693 = vtanh.pop %v1686
    %v1694 = vmul.f32 %v1692, %v1601
    %1696 = vrot.lane.b32.xlu0 %v1693, 64
    %v1697 = vpop.permute.xlu0 %1696
    %v1699 = vmul.f32 %v1692, %v1697
    %1701 = vrot.lane.b32.xlu0 %v1699, 32
    %v1702 = vpop.permute.xlu0 %1701
    %v1704 = vadd.f32 %v1694, %v1702
    %v1705 = vtanh.pop %v1704
    %1707 = vrot.lane.b32.xlu0 %v1705, 64
    %v1708 = vpop.permute.xlu0 %1707
    %v1710 = vmul.f32 %v1692, %v1708
    %1712 = vrot.lane.b32.xlu0 %v1710, 32
    %v1713 = vpop.permute.xlu0 %1712
    %1715 = vst.msk [vmem:[#allocation2 + $0x8] sm:$0x3] %vm365, %v1713
    %v1716 = vld [vmem:[#allocation3 + $0xa] sm:$0x3]
    %v1717 = vsel %vm153, %v1713, 0
    %1719 = vmatprep.subr.mxu0 0.0
    %1720 = vmatpush1.msra.mxu0 0.0
    %1721 = vmatprep.subr.mxu0 0.0
    %1722 = vmatpush1.msra.mxu0 0.0
    %1723 = vmatprep.subr.mxu0 0.0
    %1724 = vmatpush1.msra.mxu0 0.0
    %1725 = vmatprep.subr.mxu0 0.0
    %1726 = vmatpush1.msra.mxu0 0.0
    %1727 = vmatprep.subr.mxu0 0.0
    %1728 = vmatpush1.msra.mxu0 0.0
    %1729 = vmatprep.subr.mxu0 0.0
    %1730 = vmatpush1.msra.mxu0 0.0
    %1731 = vmatprep.subr.mxu0 0.0
    %1732 = vmatpush1.msra.mxu0 0.0
    %1733 = vmatprep.subr.mxu0 0.0
    %1734 = vmatpush1.msra.mxu0 0.0
    %1735 = vmatprep.subr.mxu0 0.0
    %1736 = vmatpush1.msra.mxu0 0.0
    %1737 = vmatprep.subr.mxu0 0.0
    %1738 = vmatpush1.msra.mxu0 0.0
    %1739 = vmatprep.subr.mxu0 0.0
    %1740 = vmatpush1.msra.mxu0 0.0
    %1741 = vmatprep.subr.mxu0 0.0
    %1742 = vmatpush1.msra.mxu0 0.0
    %1743 = vmatprep.subr.mxu0 0.0
    %1744 = vmatpush1.msra.mxu0 %v1097
    %1745 = vmatprep.subr.mxu0 0.0
    %1746 = vmatpush1.msra.mxu0 %v1096
    %1747 = vmatprep.subr.mxu0 0.0
    %1748 = vmatpush1.msra.mxu0 %v1095
    %1749 = vmatprep.subr.mxu0 0.0
    %1750 = vmatpush1.msra.mxu0 %v1094
    %1751 = vmatprep.subr.mxu0 0.0
    %1752 = vmatpush2.msra.mxu0 0.0
    %1753 = vmatprep.subr.mxu0 0.0
    %1754 = vmatpush2.msra.mxu0 0.0
    %1755 = vmatprep.subr.mxu0 0.0
    %1756 = vmatpush2.msra.mxu0 0.0
    %1757 = vmatprep.subr.mxu0 0.0
    %1758 = vmatpush2.msra.mxu0 0.0
    %1759 = vmatprep.subr.mxu0 0.0
    %1760 = vmatpush2.msra.mxu0 0.0
    %1761 = vmatprep.subr.mxu0 0.0
    %1762 = vmatpush2.msra.mxu0 0.0
    %1763 = vmatprep.subr.mxu0 0.0
    %1764 = vmatpush2.msra.mxu0 0.0
    %1765 = vmatprep.subr.mxu0 0.0
    %1766 = vmatpush2.msra.mxu0 0.0
    %1767 = vmatprep.subr.mxu0 0.0
    %1768 = vmatpush2.msra.mxu0 0.0
    %1769 = vmatprep.subr.mxu0 0.0
    %1770 = vmatpush2.msra.mxu0 0.0
    %1771 = vmatprep.subr.mxu0 0.0
    %1772 = vmatpush2.msra.mxu0 0.0
    %1773 = vmatprep.subr.mxu0 0.0
    %1774 = vmatpush2.msra.mxu0 0.0
    %1775 = vmatprep.subr.mxu0 0.0
    %1776 = vmatpush2.msra.mxu0 0.0
    %1777 = vmatprep.subr.mxu0 0.0
    %1778 = vmatpush2.msra.mxu0 0.0
    %1779 = vmatprep.subr.mxu0 0.0
    %1780 = vmatpush2.msra.mxu0 0.0
    %1781 = vmatprep.subr.mxu0 0.0
    %1782 = vmatpush2.msra.mxu0 0.0
    %1783 = vmatprep.mubr.f32.mxu0 0.0
    %1784 = vmatmul.mubr.f32.gmra.mxu0 %v1717
    %v1785 = vpop.f32.mrf.mxu0
    %v1786 = vadd.f32 0.0, %v1785
    %v1787 = vpop.f32.mrf.mxu0
    %1788 = vdwg.mxu0
    %v1789 = vadd.f32 %v1716, %v1786
    %v1790 = vxor.u32 %v1789, 2147483648
    %v1791 = vmul.f32 %v1790, 1.442695
    %v1792 = vpow.pop %v1791
    %v1793 = vadd.f32 %v1792, 1.0
    %v1794 = vrcp.pop %v1793
    %v1795 = vmul.f32 1.0, %v1794
    %v1796 = vtanh.pop %v1789
    %v1797 = vmul.f32 %v1795, %v1704
    %1799 = vrot.lane.b32.xlu0 %v1796, 64
    %v1800 = vpop.permute.xlu0 %1799
    %v1802 = vmul.f32 %v1795, %v1800
    %1804 = vrot.lane.b32.xlu0 %v1802, 32
    %v1805 = vpop.permute.xlu0 %1804
    %v1807 = vadd.f32 %v1797, %v1805
    %v1808 = vtanh.pop %v1807
    %1810 = vrot.lane.b32.xlu0 %v1808, 64
    %v1811 = vpop.permute.xlu0 %1810
    %v1813 = vmul.f32 %v1795, %v1811
    %1815 = vrot.lane.b32.xlu0 %v1813, 32
    %v1816 = vpop.permute.xlu0 %1815
    %1818 = vst.msk [vmem:[#allocation2 + $0xa] sm:$0x3] %vm365, %v1816
    %v1819 = vld [vmem:[#allocation3 + $0xc] sm:$0x3]
    %v1820 = vsel %vm153, %v1816, 0
    %1822 = vmatprep.subr.mxu0 0.0
    %1823 = vmatpush1.msra.mxu0 0.0
    %1824 = vmatprep.subr.mxu0 0.0
    %1825 = vmatpush1.msra.mxu0 0.0
    %1826 = vmatprep.subr.mxu0 0.0
    %1827 = vmatpush1.msra.mxu0 0.0
    %1828 = vmatprep.subr.mxu0 0.0
    %1829 = vmatpush1.msra.mxu0 0.0
    %1830 = vmatprep.subr.mxu0 0.0
    %1831 = vmatpush1.msra.mxu0 0.0
    %1832 = vmatprep.subr.mxu0 0.0
    %1833 = vmatpush1.msra.mxu0 0.0
    %1834 = vmatprep.subr.mxu0 0.0
    %1835 = vmatpush1.msra.mxu0 0.0
    %1836 = vmatprep.subr.mxu0 0.0
    %1837 = vmatpush1.msra.mxu0 0.0
    %1838 = vmatprep.subr.mxu0 0.0
    %1839 = vmatpush1.msra.mxu0 0.0
    %1840 = vmatprep.subr.mxu0 0.0
    %1841 = vmatpush1.msra.mxu0 0.0
    %1842 = vmatprep.subr.mxu0 0.0
    %1843 = vmatpush1.msra.mxu0 0.0
    %1844 = vmatprep.subr.mxu0 0.0
    %1845 = vmatpush1.msra.mxu0 0.0
    %1846 = vmatprep.subr.mxu0 0.0
    %1847 = vmatpush1.msra.mxu0 %v1097
    %1848 = vmatprep.subr.mxu0 0.0
    %1849 = vmatpush1.msra.mxu0 %v1096
    %1850 = vmatprep.subr.mxu0 0.0
    %1851 = vmatpush1.msra.mxu0 %v1095
    %1852 = vmatprep.subr.mxu0 0.0
    %1853 = vmatpush1.msra.mxu0 %v1094
    %1854 = vmatprep.subr.mxu0 0.0
    %1855 = vmatpush2.msra.mxu0 0.0
    %1856 = vmatprep.subr.mxu0 0.0
    %1857 = vmatpush2.msra.mxu0 0.0
    %1858 = vmatprep.subr.mxu0 0.0
    %1859 = vmatpush2.msra.mxu0 0.0
    %1860 = vmatprep.subr.mxu0 0.0
    %1861 = vmatpush2.msra.mxu0 0.0
    %1862 = vmatprep.subr.mxu0 0.0
    %1863 = vmatpush2.msra.mxu0 0.0
    %1864 = vmatprep.subr.mxu0 0.0
    %1865 = vmatpush2.msra.mxu0 0.0
    %1866 = vmatprep.subr.mxu0 0.0
    %1867 = vmatpush2.msra.mxu0 0.0
    %1868 = vmatprep.subr.mxu0 0.0
    %1869 = vmatpush2.msra.mxu0 0.0
    %1870 = vmatprep.subr.mxu0 0.0
    %1871 = vmatpush2.msra.mxu0 0.0
    %1872 = vmatprep.subr.mxu0 0.0
    %1873 = vmatpush2.msra.mxu0 0.0
    %1874 = vmatprep.subr.mxu0 0.0
    %1875 = vmatpush2.msra.mxu0 0.0
    %1876 = vmatprep.subr.mxu0 0.0
    %1877 = vmatpush2.msra.mxu0 0.0
    %1878 = vmatprep.subr.mxu0 0.0
    %1879 = vmatpush2.msra.mxu0 0.0
    %1880 = vmatprep.subr.mxu0 0.0
    %1881 = vmatpush2.msra.mxu0 0.0
    %1882 = vmatprep.subr.mxu0 0.0
    %1883 = vmatpush2.msra.mxu0 0.0
    %1884 = vmatprep.subr.mxu0 0.0
    %1885 = vmatpush2.msra.mxu0 0.0
    %1886 = vmatprep.mubr.f32.mxu0 0.0
    %1887 = vmatmul.mubr.f32.gmra.mxu0 %v1820
    %v1888 = vpop.f32.mrf.mxu0
    %v1889 = vadd.f32 0.0, %v1888
    %v1890 = vpop.f32.mrf.mxu0
    %1891 = vdwg.mxu0
    %v1892 = vadd.f32 %v1819, %v1889
    %v1893 = vxor.u32 %v1892, 2147483648
    %v1894 = vmul.f32 %v1893, 1.442695
    %v1895 = vpow.pop %v1894
    %v1896 = vadd.f32 %v1895, 1.0
    %v1897 = vrcp.pop %v1896
    %v1898 = vmul.f32 1.0, %v1897
    %v1899 = vtanh.pop %v1892
    %v1900 = vmul.f32 %v1898, %v1807
    %1902 = vrot.lane.b32.xlu0 %v1899, 64
    %v1903 = vpop.permute.xlu0 %1902
    %v1905 = vmul.f32 %v1898, %v1903
    %1907 = vrot.lane.b32.xlu0 %v1905, 32
    %v1908 = vpop.permute.xlu0 %1907
    %v1910 = vadd.f32 %v1900, %v1908
    %v1911 = vtanh.pop %v1910
    %1913 = vrot.lane.b32.xlu0 %v1911, 64
    %v1914 = vpop.permute.xlu0 %1913
    %v1916 = vmul.f32 %v1898, %v1914
    %1918 = vrot.lane.b32.xlu0 %v1916, 32
    %v1919 = vpop.permute.xlu0 %1918
    %1921 = vst.msk [vmem:[#allocation2 + $0xc] sm:$0x3] %vm365, %v1919
    %v1922 = vld [vmem:[#allocation3 + $0xe] sm:$0x3]
    %v1923 = vsel %vm153, %v1919, 0
    %1925 = vmatprep.subr.mxu0 0.0
    %1926 = vmatpush1.msra.mxu0 0.0
    %1927 = vmatprep.subr.mxu0 0.0
    %1928 = vmatpush1.msra.mxu0 0.0
    %1929 = vmatprep.subr.mxu0 0.0
    %1930 = vmatpush1.msra.mxu0 0.0
    %1931 = vmatprep.subr.mxu0 0.0
    %1932 = vmatpush1.msra.mxu0 0.0
    %1933 = vmatprep.subr.mxu0 0.0
    %1934 = vmatpush1.msra.mxu0 0.0
    %1935 = vmatprep.subr.mxu0 0.0
    %1936 = vmatpush1.msra.mxu0 0.0
    %1937 = vmatprep.subr.mxu0 0.0
    %1938 = vmatpush1.msra.mxu0 0.0
    %1939 = vmatprep.subr.mxu0 0.0
    %1940 = vmatpush1.msra.mxu0 0.0
    %1941 = vmatprep.subr.mxu0 0.0
    %1942 = vmatpush1.msra.mxu0 0.0
    %1943 = vmatprep.subr.mxu0 0.0
    %1944 = vmatpush1.msra.mxu0 0.0
    %1945 = vmatprep.subr.mxu0 0.0
    %1946 = vmatpush1.msra.mxu0 0.0
    %1947 = vmatprep.subr.mxu0 0.0
    %1948 = vmatpush1.msra.mxu0 0.0
    %1949 = vmatprep.subr.mxu0 0.0
    %1950 = vmatpush1.msra.mxu0 %v1097
    %1951 = vmatprep.subr.mxu0 0.0
    %1952 = vmatpush1.msra.mxu0 %v1096
    %1953 = vmatprep.subr.mxu0 0.0
    %1954 = vmatpush1.msra.mxu0 %v1095
    %1955 = vmatprep.subr.mxu0 0.0
    %1956 = vmatpush1.msra.mxu0 %v1094
    %1957 = vmatprep.subr.mxu0 0.0
    %1958 = vmatpush2.msra.mxu0 0.0
    %1959 = vmatprep.subr.mxu0 0.0
    %1960 = vmatpush2.msra.mxu0 0.0
    %1961 = vmatprep.subr.mxu0 0.0
    %1962 = vmatpush2.msra.mxu0 0.0
    %1963 = vmatprep.subr.mxu0 0.0
    %1964 = vmatpush2.msra.mxu0 0.0
    %1965 = vmatprep.subr.mxu0 0.0
    %1966 = vmatpush2.msra.mxu0 0.0
    %1967 = vmatprep.subr.mxu0 0.0
    %1968 = vmatpush2.msra.mxu0 0.0
    %1969 = vmatprep.subr.mxu0 0.0
    %1970 = vmatpush2.msra.mxu0 0.0
    %1971 = vmatprep.subr.mxu0 0.0
    %1972 = vmatpush2.msra.mxu0 0.0
    %1973 = vmatprep.subr.mxu0 0.0
    %1974 = vmatpush2.msra.mxu0 0.0
    %1975 = vmatprep.subr.mxu0 0.0
    %1976 = vmatpush2.msra.mxu0 0.0
    %1977 = vmatprep.subr.mxu0 0.0
    %1978 = vmatpush2.msra.mxu0 0.0
    %1979 = vmatprep.subr.mxu0 0.0
    %1980 = vmatpush2.msra.mxu0 0.0
    %1981 = vmatprep.subr.mxu0 0.0
    %1982 = vmatpush2.msra.mxu0 0.0
    %1983 = vmatprep.subr.mxu0 0.0
    %1984 = vmatpush2.msra.mxu0 0.0
    %1985 = vmatprep.subr.mxu0 0.0
    %1986 = vmatpush2.msra.mxu0 0.0
    %1987 = vmatprep.subr.mxu0 0.0
    %1988 = vmatpush2.msra.mxu0 0.0
    %1989 = vmatprep.mubr.f32.mxu0 0.0
    %1990 = vmatmul.mubr.f32.gmra.mxu0 %v1923
    %v1991 = vpop.f32.mrf.mxu0
    %v1992 = vadd.f32 0.0, %v1991
    %v1993 = vpop.f32.mrf.mxu0
    %1994 = vdwg.mxu0
    %v1995 = vadd.f32 %v1922, %v1992
    %v1996 = vxor.u32 %v1995, 2147483648
    %v1997 = vmul.f32 %v1996, 1.442695
    %v1998 = vpow.pop %v1997
    %v1999 = vadd.f32 %v1998, 1.0
    %v2000 = vrcp.pop %v1999
    %v2001 = vmul.f32 1.0, %v2000
    %v2002 = vtanh.pop %v1995
    %v2003 = vmul.f32 %v2001, %v1910
    %2005 = vrot.lane.b32.xlu0 %v2002, 64
    %v2006 = vpop.permute.xlu0 %2005
    %v2008 = vmul.f32 %v2001, %v2006
    %2010 = vrot.lane.b32.xlu0 %v2008, 32
    %v2011 = vpop.permute.xlu0 %2010
    %v2013 = vadd.f32 %v2003, %v2011
    %v2014 = vtanh.pop %v2013
    %2016 = vrot.lane.b32.xlu0 %v2014, 64
    %v2017 = vpop.permute.xlu0 %2016
    %v2019 = vmul.f32 %v2001, %v2017
    %2021 = vrot.lane.b32.xlu0 %v2019, 32
    %v2022 = vpop.permute.xlu0 %2021
    %2024 = vst.msk [vmem:[#allocation2 + $0xe] sm:$0x3] %vm365, %v2022
    %2025 = vst.msk [vmem:[#allocation6 + $0x2] sm:$0x3] %vm365, %v2022
    %2027 = vrot.lane.b32.xlu0 %v2013, 96
    %v2028 = vpop.permute.xlu0 %2027
    %2030 = vst.msk [vmem:[#allocation8 + $0x2] sm:$0x3] %vm365, %v2028
    %v2031 = vld [vmem:[#allocation2] sm:$0xff]
    %v2032 = vld [vmem:[#allocation2 + $0x8] sm:$0xff]
    %v2033 = vld [vmem:[%s10] sm:$0xff]
    %v2034 = vld [vmem:[%s10 + $0x8] sm:$0xff]
    %v2035 = vld [vmem:[%s10 + $0x10] sm:$0xff]
    %v2036 = vld [vmem:[%s10 + $0x18] sm:$0xff]
    %v2037 = vld [vmem:[%s11] sm:$0x1]
    %v2039 = vlaneseq
    %v2040 = vshrl.u32 %v2039, 7
    %v2041 = vsub.s32 0, %v2040
    %v2042 = vrot.slane %v2037, %v2041
    %v2045 = vsel %vm153, %v2031, 0
    %v2048 = vsel %vm153, %v2032, 0
    %2050 = vmatprep.subr.mxu0 0.0
    %2051 = vmatpush1.msra.mxu0 0.0
    %2052 = vmatprep.subr.mxu0 0.0
    %2053 = vmatpush1.msra.mxu0 0.0
    %2054 = vmatprep.subr.mxu0 0.0
    %2055 = vmatpush1.msra.mxu0 0.0
    %2056 = vmatprep.subr.mxu0 0.0
    %2057 = vmatpush1.msra.mxu0 0.0
    %2058 = vmatprep.subr.mxu0 0.0
    %2059 = vmatpush1.msra.mxu0 0.0
    %2060 = vmatprep.subr.mxu0 0.0
    %2061 = vmatpush1.msra.mxu0 0.0
    %2062 = vmatprep.subr.mxu0 0.0
    %2063 = vmatpush1.msra.mxu0 0.0
    %2064 = vmatprep.subr.mxu0 0.0
    %2065 = vmatpush1.msra.mxu0 0.0
    %2066 = vmatprep.subr.mxu0 0.0
    %2067 = vmatpush1.msra.mxu0 0.0
    %2068 = vmatprep.subr.mxu0 0.0
    %2069 = vmatpush1.msra.mxu0 0.0
    %2070 = vmatprep.subr.mxu0 0.0
    %2071 = vmatpush1.msra.mxu0 0.0
    %2072 = vmatprep.subr.mxu0 0.0
    %2073 = vmatpush1.msra.mxu0 0.0
    %2074 = vmatprep.subr.mxu0 0.0
    %2075 = vmatpush1.msra.mxu0 %v2036
    %2076 = vmatprep.subr.mxu0 0.0
    %2077 = vmatpush1.msra.mxu0 %v2035
    %2078 = vmatprep.subr.mxu0 0.0
    %2079 = vmatpush1.msra.mxu0 %v2034
    %2080 = vmatprep.subr.mxu0 0.0
    %2081 = vmatpush1.msra.mxu0 %v2033
    %2082 = vmatprep.subr.mxu0 0.0
    %2083 = vmatpush2.msra.mxu0 0.0
    %2084 = vmatprep.subr.mxu0 0.0
    %2085 = vmatpush2.msra.mxu0 0.0
    %2086 = vmatprep.subr.mxu0 0.0
    %2087 = vmatpush2.msra.mxu0 0.0
    %2088 = vmatprep.subr.mxu0 0.0
    %2089 = vmatpush2.msra.mxu0 0.0
    %2090 = vmatprep.subr.mxu0 0.0
    %2091 = vmatpush2.msra.mxu0 0.0
    %2092 = vmatprep.subr.mxu0 0.0
    %2093 = vmatpush2.msra.mxu0 0.0
    %2094 = vmatprep.subr.mxu0 0.0
    %2095 = vmatpush2.msra.mxu0 0.0
    %2096 = vmatprep.subr.mxu0 0.0
    %2097 = vmatpush2.msra.mxu0 0.0
    %2098 = vmatprep.subr.mxu0 0.0
    %2099 = vmatpush2.msra.mxu0 0.0
    %2100 = vmatprep.subr.mxu0 0.0
    %2101 = vmatpush2.msra.mxu0 0.0
    %2102 = vmatprep.subr.mxu0 0.0
    %2103 = vmatpush2.msra.mxu0 0.0
    %2104 = vmatprep.subr.mxu0 0.0
    %2105 = vmatpush2.msra.mxu0 0.0
    %2106 = vmatprep.subr.mxu0 0.0
    %2107 = vmatpush2.msra.mxu0 0.0
    %2108 = vmatprep.subr.mxu0 0.0
    %2109 = vmatpush2.msra.mxu0 0.0
    %2110 = vmatprep.subr.mxu0 0.0
    %2111 = vmatpush2.msra.mxu0 0.0
    %2112 = vmatprep.subr.mxu0 0.0
    %2113 = vmatpush2.msra.mxu0 0.0
    %2114 = vmatprep.mubr.f32.mxu0 0.0
    %2115 = vmatmul.mubr.f32.gmra.mxu0 %v2045
    %v2116 = vpop.f32.mrf.mxu0
    %v2117 = vadd.f32 %v2042, %v2116
    %v2118 = vpop.f32.mrf.mxu0
    %2119 = vmatprep.mubr.f32.mxu0 0.0
    %2120 = vmatmul.mubr.f32.gmra.mxu0 %v2048
    %v2121 = vpop.f32.mrf.mxu0
    %v2122 = vadd.f32 %v2042, %v2121
    %v2123 = vpop.f32.mrf.mxu0
    %2124 = vdwg.mxu0
    %2125 = vst [vmem:[#allocation4] sm:$0xff] %v2117
    %2126 = vst [vmem:[#allocation4 + $0x8] sm:$0xff] %v2122
    // Predicated region
    $region50: #{rnn_model_forward_impl.1} parent=1 // pred_check
      _
    $region51: #{rnn_model_forward_impl.1} parent=1 // pred_check_branch
      %2128 = sbr.rel (0) target = $region53
    $region52: #{rnn_model_forward_impl.1} parent=1 // pred_region
      %s2130 = ssub.s32 256, 256
      %2131 = vsyncadd [#allocation5], %s2130
      %s2132 = sshll.u32 [#allocation4], 4
      %s2133 = int_to_ptr.vmem [resolvable:$true] %s2132
      %2138 = dma.vmem_to_hbm [thread:$0]  %s2133, 256, %s12, [#allocation5], 128, 128, 8
    $region53: #{rnn_model_forward_impl.1} parent=1 // pred_fallthru
      _
    // Predicated region
    $region54: #{rnn_model_forward_impl.1} parent=1 // pred_check
      _
    $region55: #{rnn_model_forward_impl.1} parent=1 // pred_check_branch
      %2140 = sbr.rel (0) target = $region57
    $region56: #{rnn_model_forward_impl.1} parent=1 // pred_region
      %s2142 = ssub.s32 64, 64
      %2143 = vsyncadd [#allocation7], %s2142
      %s2145 = sshll.u32 [#allocation6], 4
      %s2146 = int_to_ptr.vmem [resolvable:$true] %s2145
      %2148 = dma.vmem_to_hbm [thread:$0]  %s2146, 64, %s13, [#allocation7]
    $region57: #{rnn_model_forward_impl.1} parent=1 // pred_fallthru
      _
    // Predicated region
    $region58: #{rnn_model_forward_impl.1} parent=1 // pred_check
      _
    $region59: #{rnn_model_forward_impl.1} parent=1 // pred_check_branch
      %2150 = sbr.rel (0) target = $region61
    $region60: #{rnn_model_forward_impl.1} parent=1 // pred_region
      %s2152 = ssub.s32 64, 64
      %2153 = vsyncadd [#allocation7], %s2152
      %s2155 = sshll.u32 [#allocation8], 4
      %s2156 = int_to_ptr.vmem [resolvable:$true] %s2155
      %2158 = dma.vmem_to_hbm [thread:$0]  %s2156, 64, %s14, [#allocation7]
    $region61: #{rnn_model_forward_impl.1} parent=1 // pred_fallthru
      _
    // Predicated region
    $region62: #{rnn_model_forward_impl.1} parent=1 // pred_check
      _
    $region63: #{rnn_model_forward_impl.1} parent=1 // pred_check_branch
      %2160 = sbr.rel (0) target = $region65
    $region64: #{rnn_model_forward_impl.1} parent=1 // pred_region
      %2161 = dma.done [#allocation5], 256
    $region65: #{rnn_model_forward_impl.1} parent=1 // pred_fallthru
      _
    // Predicated region
    $region66: #{rnn_model_forward_impl.1} parent=1 // pred_check
      _
    $region67: #{rnn_model_forward_impl.1} parent=1 // pred_check_branch
      %2163 = sbr.rel (0) target = $region69
    $region68: #{rnn_model_forward_impl.1} parent=1 // pred_region
      %2164 = dma.done [#allocation7], 64
    $region69: #{rnn_model_forward_impl.1} parent=1 // pred_fallthru
      _
    // Predicated region
    $region70: #{rnn_model_forward_impl.1} parent=1 // pred_check
      _
    $region71: #{rnn_model_forward_impl.1} parent=1 // pred_check_branch
      %2166 = sbr.rel (0) target = $region73
    $region72: #{rnn_model_forward_impl.1} parent=1 // pred_region
      %2167 = dma.done [#allocation7], 64
    $region73: #{rnn_model_forward_impl.1} parent=1 // pred_fallthru
      _
    %2168 = vsyncpa [#allocation5], 1
    %2169 = vsyncpa [#allocation7], 1

</llo_original>
